<compile_context>
chip_gen: v6e
topology: v6e:2x2x1
jax: 0.10.0
libtpu: 0.0.40
codegen_flags: <defaults>
</compile_context>

<pallas_src>
import functools

import jax
import jax.numpy as jnp
from jax import lax
from jax.experimental import pallas as pl
from jax.experimental.pallas import tpu as pltpu


def _mxu_cast(a, mxu_dtype):
    """Cast an MXU operand to the compute dtype (None = keep stored dtype)."""
    return a if mxu_dtype is None else a.astype(mxu_dtype)


def fused_mlp_kernel(*refs, num_layers, scale, temp, use_scale, eps,
                     include_last, mxu_dtype):
    # refs = (x_ref, w_0, p_0, w_1, p_1, ..., w_{L-1}, p_{L-1}, out_ref)
    # p_i packs rows [b; gamma; beta] with shape (3, d_out_i).
    x_ref = refs[0]
    out_ref = refs[-1]

    z = x_ref[...].astype(jnp.float32)                     # (N, D_in) f32 value

    multiplier = 1.0 + float(int(use_scale)) * scale
    inv_temp = 1.0 / temp

    for i in range(num_layers):
        w_ref = refs[1 + 2 * i]
        p_ref = refs[2 + 2 * i]

        p = p_ref[...].astype(jnp.float32)                 # (3, d_out)
        b = p[0:1, :]                                      # (1, d_out)
        gamma = p[1:2, :]
        beta = p[2:3, :]

        # ----- Linear: y = z @ W + b (MXU, f32 accumulation)
        y = jnp.dot(_mxu_cast(z, mxu_dtype), _mxu_cast(w_ref[...], mxu_dtype),
                    preferred_element_type=jnp.float32) + b      # (N, d_out)

        apply_norm_act = (i < num_layers - 1) or include_last
        if apply_norm_act:
            # ----- ContraNorm: Gram = y.T @ y via contraction on dim 0
            # (no explicit transpose emitted in the kernel; any hidden XLU
            #  transpose at lowering is free here — XLU slot is idle).
            yc_mxu = _mxu_cast(y, mxu_dtype)
            gram = lax.dot_general(
                yc_mxu, yc_mxu,
                dimension_numbers=(((0,), (0,)), ((), ())),
                preferred_element_type=jnp.float32) * inv_temp   # (d_out, d_out)

            # row-wise softmax (dim=1); exact division (only d_out rows, cheap)
            gram = gram - jnp.max(gram, axis=1, keepdims=True)
            e = jnp.exp(gram)
            weights = e / jnp.sum(e, axis=1, keepdims=True)

            y = multiplier * y - scale * jnp.dot(
                _mxu_cast(y, mxu_dtype), _mxu_cast(weights, mxu_dtype),
                preferred_element_type=jnp.float32)

            # ----- BatchNorm1d (training-mode batch stats, biased variance),
            #       reusing the centered tensor once.
            mean = jnp.mean(y, axis=0, keepdims=True)            # (1, d_out)
            yc = y - mean
            var = jnp.mean(yc * yc, axis=0, keepdims=True)       # (1, d_out)
            y = yc * lax.rsqrt(var + eps) * gamma + beta

            # ----- activation (ReLU)
            y = jnp.maximum(y, 0.0)

        z = y

    out_ref[...] = z.astype(out_ref.dtype)


def mlp_forward(x, params, *, scale, temp, use_scale, eps=1e-5,
                include_last=True, mxu_dtype=None):
    """Fused MLP forward (with_graph=False, norm='cn', ReLU, dropout=0).

    x: (N, D_in); params["w"][i]: (d_in_i, d_out_i); b/gamma/beta: (d_out_i,).
    mxu_dtype: None (keep f32 operands) or jnp.bfloat16 for v6e/v7x MXU speed.
    """
    num_layers = len(params["w"])
    n = x.shape[0]
    d_out_final = params["w"][-1].shape[1]

    inputs = [x]
    in_specs = [pl.BlockSpec(x.shape, lambda: (0, 0))]
    for i in range(num_layers):
        w = params["w"][i]
        apply_na = (i < num_layers - 1) or include_last
        if apply_na:
            g, bt = params["gamma"][i], params["beta"][i]
        else:
            g = jnp.ones_like(params["b"][i])
            bt = jnp.zeros_like(params["b"][i])
        packed = jnp.stack([params["b"][i], g, bt], axis=0)      # (3, d_out)
        inputs += [w, packed]
        in_specs += [pl.BlockSpec(w.shape, lambda: (0, 0)),
                     pl.BlockSpec(packed.shape, lambda: (0, 0))]

    kernel = functools.partial(
        fused_mlp_kernel, num_layers=num_layers, scale=scale, temp=temp,
        use_scale=use_scale, eps=eps, include_last=include_last,
        mxu_dtype=mxu_dtype)

    # TODO(synk): for large N, switch to a tiled multi-pass design (per-tile
    # Gram + BN-moment accumulation -> softmax -> apply), with an N grid axis
    # marked "parallel" / core_parallel so v7x's second TensorCore is used and
    # tiles budgeted against v7x's 64 MiB VMEM. At these sizes a single fused
    # block is optimal.
    return pl.pallas_call(
        kernel,
        out_shape=jax.ShapeDtypeStruct((n, d_out_final), x.dtype),
        in_specs=in_specs,
        out_specs=pl.BlockSpec((n, d_out_final), lambda: (0, 0)),
    )(*inputs)


def mlp_ref(x, params, *, scale, temp, use_scale, eps=1e-5, include_last=True,
            mxu_dtype=None):
    """Pure-JAX reference matching the PyTorch MLP (training-mode BN)."""
    def c(a):
        return a if mxu_dtype is None else a.astype(mxu_dtype)

    num_layers = len(params["w"])
    for i in range(num_layers):
        x = jnp.dot(c(x), c(params["w"][i]),
                    preferred_element_type=jnp.float32) + params["b"][i][None, :]
        if (i < num_layers - 1) or include_last:
            gram = jnp.dot(c(x).T, c(x),
                           preferred_element_type=jnp.float32) / temp
            wts = jax.nn.softmax(gram, axis=1)
            multiplier = 1.0 + float(int(use_scale)) * scale
            x = multiplier * x - scale * jnp.dot(
                c(x), c(wts), preferred_element_type=jnp.float32)
            mean = jnp.mean(x, axis=0, keepdims=True)
            xc = x - mean
            var = jnp.mean(xc * xc, axis=0, keepdims=True)
            x = (xc / jnp.sqrt(var + eps) * params["gamma"][i][None, :]
                 + params["beta"][i][None, :])
            x = jnp.maximum(x, 0.0)
    # TODO(synk): nn.Dropout with p>0 (training mode) would need pltpu PRNG;
    # here dropout=0.0 (identity), matching eval-mode / p=0 semantics.
    return x


if __name__ == "__main__":
    key = jax.random.PRNGKey(0)

    # Small, lane-dense shapes: 64 rows, input_dim=32, hidden=output=128.
    N, D_IN, D_HID, D_OUT = 64, 32, 128, 128
    NUM_LAYERS = 2
    scale, temp, use_scale = 0.2, 1.0, True

    keys = jax.random.split(key, 1 + 4 * NUM_LAYERS)
    feats = jax.random.normal(keys[0], (N, D_IN), dtype=jnp.float32)

    params = {"w": [], "b": [], "gamma": [], "beta": []}
    dims = [D_IN] + [D_HID] * (NUM_LAYERS - 1) + [D_OUT]
    for i in range(NUM_LAYERS):
        d_in, d_out = dims[i], dims[i + 1]
        kw, kb, kg, kbt = keys[1 + 4 * i: 1 + 4 * (i + 1)]
        params["w"].append(
            jax.random.normal(kw, (d_in, d_out), jnp.float32) / jnp.sqrt(d_in))
        params["b"].append(
            0.1 * jax.random.normal(kb, (d_out,), jnp.float32))
        params["gamma"].append(
            jnp.ones((d_out,), jnp.float32)
            + 0.1 * jax.random.normal(kg, (d_out,), jnp.float32))
        params["beta"].append(
            0.1 * jax.random.normal(kbt, (d_out,), jnp.float32))

    # --- f32 MXU path: tight parity with the reference ---------------------
    out_f32 = jax.block_until_ready(
        mlp_forward(feats, params, scale=scale, temp=temp,
                    use_scale=use_scale, mxu_dtype=None))
    ref_f32 = mlp_ref(feats, params, scale=scale, temp=temp,
                      use_scale=use_scale, mxu_dtype=None)
    assert out_f32.shape == (N, D_OUT)
    assert jnp.allclose(out_f32, ref_f32, atol=1e-4, rtol=1e-4), (
        f"f32 max abs err = {jnp.max(jnp.abs(out_f32 - ref_f32))}")

    # --- bf16-operand MXU path (v6e/v7x fast path), f32 accumulation --------
    out_bf16 = jax.block_until_ready(
        mlp_forward(feats, params, scale=scale, temp=temp,
                    use_scale=use_scale, mxu_dtype=jnp.bfloat16))
    ref_bf16 = mlp_ref(feats, params, scale=scale, temp=temp,
                       use_scale=use_scale, mxu_dtype=jnp.bfloat16)
    assert jnp.allclose(out_bf16, ref_bf16, atol=5e-3, rtol=5e-3), (
        f"bf16 max abs err = {jnp.max(jnp.abs(out_bf16 - ref_bf16))}")

    print("KERNEL_OK")
</pallas_src>

<mosaic_0001>
module attributes {stable_mosaic.version = 11 : i64} {
  func.func @fused_mlp_kernel(%arg0: memref<64x32xf32, #tpu.memory_space<vmem>>, %arg1: memref<32x128xf32, #tpu.memory_space<vmem>>, %arg2: memref<3x128xf32, #tpu.memory_space<vmem>>, %arg3: memref<128x128xf32, #tpu.memory_space<vmem>>, %arg4: memref<3x128xf32, #tpu.memory_space<vmem>>, %arg5: memref<64x128xf32, #tpu.memory_space<vmem>>) attributes {dimension_semantics = [], scalar_prefetch = 0 : i64, scratch_operands = 0 : i64, tpu.core_type = #tpu.core_type<tc>} {
    %c0 = arith.constant 0 : index
    %c0_0 = arith.constant 0 : index
    %0 = vector.load %arg0[%c0, %c0_0] : memref<64x32xf32, #tpu.memory_space<vmem>>, vector<64x32xf32>
    %c0_1 = arith.constant 0 : index
    %c0_2 = arith.constant 0 : index
    %1 = vector.load %arg2[%c0_1, %c0_2] : memref<3x128xf32, #tpu.memory_space<vmem>>, vector<3x128xf32>
    %2 = vector.extract_strided_slice %1 {offsets = [0, 0], sizes = [1, 128], strides = [1, 1]} : vector<3x128xf32> to vector<1x128xf32>
    %3 = vector.extract_strided_slice %1 {offsets = [1, 0], sizes = [1, 128], strides = [1, 1]} : vector<3x128xf32> to vector<1x128xf32>
    %4 = vector.extract_strided_slice %1 {offsets = [2, 0], sizes = [1, 128], strides = [1, 1]} : vector<3x128xf32> to vector<1x128xf32>
    %c0_3 = arith.constant 0 : index
    %c0_4 = arith.constant 0 : index
    %5 = vector.load %arg1[%c0_3, %c0_4] : memref<32x128xf32, #tpu.memory_space<vmem>>, vector<32x128xf32>
    %cst = arith.constant dense<0.000000e+00> : vector<64x128xf32>
    %6 = tpu.matmul %0, %5, %cst {dimension_numbers = #tpu.dot_dimension_numbers<[1], [0], [0], [1], [0, 0, 1, 1], [], []>} : vector<64x32xf32>, vector<32x128xf32>, vector<64x128xf32> -> vector<64x128xf32>
    %7 = vector.broadcast %2 : vector<1x128xf32> to vector<64x128xf32>
    %8 = arith.addf %6, %7 : vector<64x128xf32>
    %cst_5 = arith.constant dense<0.000000e+00> : vector<128x128xf32>
    %9 = tpu.matmul %8, %8, %cst_5 {dimension_numbers = #tpu.dot_dimension_numbers<[0], [0], [1], [1], [0, 1, 1, 1], [], []>} : vector<64x128xf32>, vector<64x128xf32>, vector<128x128xf32> -> vector<128x128xf32>
    %cst_6 = arith.constant 1.000000e+00 : f32
    %10 = vector.broadcast %cst_6 : f32 to vector<128x128xf32>
    %11 = arith.mulf %9, %10 : vector<128x128xf32>
    %cst_7 = arith.constant dense<0xFF800000> : vector<128xf32>
    %12 = vector.multi_reduction <maximumf>, %11, %cst_7 [1] : vector<128x128xf32> to vector<128xf32>
    %13 = vector.shape_cast %12 : vector<128xf32> to vector<128x1xf32>
    %14 = vector.broadcast %13 : vector<128x1xf32> to vector<128x128xf32>
    %15 = arith.subf %11, %14 : vector<128x128xf32>
    %16 = math.exp %15 : vector<128x128xf32>
    %cst_8 = arith.constant dense<0.000000e+00> : vector<128xf32>
    %17 = vector.multi_reduction <add>, %16, %cst_8 [1] : vector<128x128xf32> to vector<128xf32>
    %18 = vector.shape_cast %17 : vector<128xf32> to vector<128x1xf32>
    %19 = vector.broadcast %18 : vector<128x1xf32> to vector<128x128xf32>
    %20 = arith.divf %16, %19 : vector<128x128xf32>
    %cst_9 = arith.constant 1.200000e+00 : f32
    %21 = vector.broadcast %cst_9 : f32 to vector<64x128xf32>
    %22 = arith.mulf %21, %8 : vector<64x128xf32>
    %cst_10 = arith.constant dense<0.000000e+00> : vector<64x128xf32>
    %23 = tpu.matmul %8, %20, %cst_10 {dimension_numbers = #tpu.dot_dimension_numbers<[1], [0], [0], [1], [0, 0, 1, 1], [], []>} : vector<64x128xf32>, vector<128x128xf32>, vector<64x128xf32> -> vector<64x128xf32>
    %cst_11 = arith.constant 2.000000e-01 : f32
    %24 = vector.broadcast %cst_11 : f32 to vector<64x128xf32>
    %25 = arith.mulf %24, %23 : vector<64x128xf32>
    %26 = arith.subf %22, %25 : vector<64x128xf32>
    %cst_12 = arith.constant dense<0.000000e+00> : vector<128xf32>
    %27 = vector.multi_reduction <add>, %26, %cst_12 [0] : vector<64x128xf32> to vector<128xf32>
    %28 = vector.shape_cast %27 : vector<128xf32> to vector<1x128xf32>
    %cst_13 = arith.constant 6.400000e+01 : f32
    %29 = vector.broadcast %cst_13 : f32 to vector<1x128xf32>
    %30 = arith.divf %28, %29 : vector<1x128xf32>
    %31 = vector.broadcast %30 : vector<1x128xf32> to vector<64x128xf32>
    %32 = arith.subf %26, %31 : vector<64x128xf32>
    %33 = arith.mulf %32, %32 : vector<64x128xf32>
    %cst_14 = arith.constant dense<0.000000e+00> : vector<128xf32>
    %34 = vector.multi_reduction <add>, %33, %cst_14 [0] : vector<64x128xf32> to vector<128xf32>
    %35 = vector.shape_cast %34 : vector<128xf32> to vector<1x128xf32>
    %cst_15 = arith.constant 6.400000e+01 : f32
    %36 = vector.broadcast %cst_15 : f32 to vector<1x128xf32>
    %37 = arith.divf %35, %36 : vector<1x128xf32>
    %cst_16 = arith.constant 9.99999974E-6 : f32
    %38 = vector.broadcast %cst_16 : f32 to vector<1x128xf32>
    %39 = arith.addf %37, %38 : vector<1x128xf32>
    %40 = math.rsqrt %39 : vector<1x128xf32>
    %41 = vector.broadcast %40 : vector<1x128xf32> to vector<64x128xf32>
    %42 = arith.mulf %32, %41 : vector<64x128xf32>
    %43 = vector.broadcast %3 : vector<1x128xf32> to vector<64x128xf32>
    %44 = arith.mulf %42, %43 : vector<64x128xf32>
    %45 = vector.broadcast %4 : vector<1x128xf32> to vector<64x128xf32>
    %46 = arith.addf %44, %45 : vector<64x128xf32>
    %cst_17 = arith.constant 0.000000e+00 : f32
    %47 = vector.broadcast %cst_17 : f32 to vector<64x128xf32>
    %48 = arith.maximumf %46, %47 : vector<64x128xf32>
    %c0_18 = arith.constant 0 : index
    %c0_19 = arith.constant 0 : index
    %49 = vector.load %arg4[%c0_18, %c0_19] : memref<3x128xf32, #tpu.memory_space<vmem>>, vector<3x128xf32>
    %50 = vector.extract_strided_slice %49 {offsets = [0, 0], sizes = [1, 128], strides = [1, 1]} : vector<3x128xf32> to vector<1x128xf32>
    %51 = vector.extract_strided_slice %49 {offsets = [1, 0], sizes = [1, 128], strides = [1, 1]} : vector<3x128xf32> to vector<1x128xf32>
    %52 = vector.extract_strided_slice %49 {offsets = [2, 0], sizes = [1, 128], strides = [1, 1]} : vector<3x128xf32> to vector<1x128xf32>
    %c0_20 = arith.constant 0 : index
    %c0_21 = arith.constant 0 : index
    %53 = vector.load %arg3[%c0_20, %c0_21] : memref<128x128xf32, #tpu.memory_space<vmem>>, vector<128x128xf32>
    %cst_22 = arith.constant dense<0.000000e+00> : vector<64x128xf32>
    %54 = tpu.matmul %48, %53, %cst_22 {dimension_numbers = #tpu.dot_dimension_numbers<[1], [0], [0], [1], [0, 0, 1, 1], [], []>} : vector<64x128xf32>, vector<128x128xf32>, vector<64x128xf32> -> vector<64x128xf32>
    %55 = vector.broadcast %50 : vector<1x128xf32> to vector<64x128xf32>
    %56 = arith.addf %54, %55 : vector<64x128xf32>
    %cst_23 = arith.constant dense<0.000000e+00> : vector<128x128xf32>
    %57 = tpu.matmul %56, %56, %cst_23 {dimension_numbers = #tpu.dot_dimension_numbers<[0], [0], [1], [1], [0, 1, 1, 1], [], []>} : vector<64x128xf32>, vector<64x128xf32>, vector<128x128xf32> -> vector<128x128xf32>
    %cst_24 = arith.constant 1.000000e+00 : f32
    %58 = vector.broadcast %cst_24 : f32 to vector<128x128xf32>
    %59 = arith.mulf %57, %58 : vector<128x128xf32>
    %cst_25 = arith.constant dense<0xFF800000> : vector<128xf32>
    %60 = vector.multi_reduction <maximumf>, %59, %cst_25 [1] : vector<128x128xf32> to vector<128xf32>
    %61 = vector.shape_cast %60 : vector<128xf32> to vector<128x1xf32>
    %62 = vector.broadcast %61 : vector<128x1xf32> to vector<128x128xf32>
    %63 = arith.subf %59, %62 : vector<128x128xf32>
    %64 = math.exp %63 : vector<128x128xf32>
    %cst_26 = arith.constant dense<0.000000e+00> : vector<128xf32>
    %65 = vector.multi_reduction <add>, %64, %cst_26 [1] : vector<128x128xf32> to vector<128xf32>
    %66 = vector.shape_cast %65 : vector<128xf32> to vector<128x1xf32>
    %67 = vector.broadcast %66 : vector<128x1xf32> to vector<128x128xf32>
    %68 = arith.divf %64, %67 : vector<128x128xf32>
    %cst_27 = arith.constant 1.200000e+00 : f32
    %69 = vector.broadcast %cst_27 : f32 to vector<64x128xf32>
    %70 = arith.mulf %69, %56 : vector<64x128xf32>
    %cst_28 = arith.constant dense<0.000000e+00> : vector<64x128xf32>
    %71 = tpu.matmul %56, %68, %cst_28 {dimension_numbers = #tpu.dot_dimension_numbers<[1], [0], [0], [1], [0, 0, 1, 1], [], []>} : vector<64x128xf32>, vector<128x128xf32>, vector<64x128xf32> -> vector<64x128xf32>
    %cst_29 = arith.constant 2.000000e-01 : f32
    %72 = vector.broadcast %cst_29 : f32 to vector<64x128xf32>
    %73 = arith.mulf %72, %71 : vector<64x128xf32>
    %74 = arith.subf %70, %73 : vector<64x128xf32>
    %cst_30 = arith.constant dense<0.000000e+00> : vector<128xf32>
    %75 = vector.multi_reduction <add>, %74, %cst_30 [0] : vector<64x128xf32> to vector<128xf32>
    %76 = vector.shape_cast %75 : vector<128xf32> to vector<1x128xf32>
    %cst_31 = arith.constant 6.400000e+01 : f32
    %77 = vector.broadcast %cst_31 : f32 to vector<1x128xf32>
    %78 = arith.divf %76, %77 : vector<1x128xf32>
    %79 = vector.broadcast %78 : vector<1x128xf32> to vector<64x128xf32>
    %80 = arith.subf %74, %79 : vector<64x128xf32>
    %81 = arith.mulf %80, %80 : vector<64x128xf32>
    %cst_32 = arith.constant dense<0.000000e+00> : vector<128xf32>
    %82 = vector.multi_reduction <add>, %81, %cst_32 [0] : vector<64x128xf32> to vector<128xf32>
    %83 = vector.shape_cast %82 : vector<128xf32> to vector<1x128xf32>
    %cst_33 = arith.constant 6.400000e+01 : f32
    %84 = vector.broadcast %cst_33 : f32 to vector<1x128xf32>
    %85 = arith.divf %83, %84 : vector<1x128xf32>
    %cst_34 = arith.constant 9.99999974E-6 : f32
    %86 = vector.broadcast %cst_34 : f32 to vector<1x128xf32>
    %87 = arith.addf %85, %86 : vector<1x128xf32>
    %88 = math.rsqrt %87 : vector<1x128xf32>
    %89 = vector.broadcast %88 : vector<1x128xf32> to vector<64x128xf32>
    %90 = arith.mulf %80, %89 : vector<64x128xf32>
    %91 = vector.broadcast %51 : vector<1x128xf32> to vector<64x128xf32>
    %92 = arith.mulf %90, %91 : vector<64x128xf32>
    %93 = vector.broadcast %52 : vector<1x128xf32> to vector<64x128xf32>
    %94 = arith.addf %92, %93 : vector<64x128xf32>
    %cst_35 = arith.constant 0.000000e+00 : f32
    %95 = vector.broadcast %cst_35 : f32 to vector<64x128xf32>
    %96 = arith.maximumf %94, %95 : vector<64x128xf32>
    %c0_36 = arith.constant 0 : index
    %c0_37 = arith.constant 0 : index
    %97 = vector.load %arg5[%c0_36, %c0_37] : memref<64x128xf32, #tpu.memory_space<vmem>>, vector<64x128xf32>
    tpu.vector_store %arg5[%c0_36, %c0_37], %96 {strides = array<i32>} : memref<64x128xf32, #tpu.memory_space<vmem>>, vector<64x128xf32>,
    return
  }
}

</mosaic_0001>

<llo_original>
// kernel: tpu_custom_call.1
$region0: #{tpu_custom_call.1}
  #allocation0 [shape = 'u32[]', space=smem, size = 0x4, offset = 0x4, fixed_abs, tag = 'smem constant byte address 0x4 - core index']
  #allocation1 [shape = 'u32[144,128]{1,0:T(1,128)}', space=vmem, size = 0x12000, scoped, tag = 'internal scratch']
  %s0 = inlined_call_operand.vmem [shape: f32[64,32], index: 0, kind: input, shape index: {}]
  %s1 = inlined_call_operand.vmem [shape: f32[32,128], index: 1, kind: input, shape index: {}]
  %s2 = inlined_call_operand.vmem [shape: f32[3,128], index: 2, kind: input, shape index: {}]
  %s3 = inlined_call_operand.hbm [shape: f32[128,128], index: 3, kind: input, shape index: {}]
  %s4 = inlined_call_operand.vmem [shape: f32[3,128], index: 4, kind: input, shape index: {}]
  %s5 = inlined_call_operand.hbm [shape: f32[64,128], index: 5, kind: output, shape index: {}]
  %s6 = sld [smem:[#allocation0]]
  $region34: #{tpu_custom_call.1} parent=0
    _
  %s8 = ssub.s32 1, %s6
  %s9 = scalar_select 0, %s8, %s6
  $region1: #{tpu_custom_call.1} parent=0
    #allocation2 [shape = 'u8[65536]{0}', space=vmem, size = 0x10000, scoped, tag = 'input window, operand 3, single buffered']
    #allocation3 [shape = 's32[1]{0}', space=sflag, size = 0x4, scoped, tag = 'scoped memory for tpu_custom_call.1']
    #allocation4 [shape = 's32[1]{0}', space=sflag, size = 0x4, scoped, tag = 'scoped memory for tpu_custom_call.1']
    #allocation5 [shape = 'u8[32768]{0}', space=vmem, size = 0x8000, scoped, tag = 'output window, operand 0, single buffered']
    %10 = vsyncpa [#allocation3], 0
    %11 = vsyncpa [#allocation4], 0
    // Predicated region
    $region2: #{tpu_custom_call.1} parent=1 // pred_check
      _
    $region3: #{tpu_custom_call.1} parent=1 // pred_check_branch
      %13 = sbr.rel (0) target = $region5
    $region4: #{tpu_custom_call.1} parent=1 // pred_region
      _
    $region5: #{tpu_custom_call.1} parent=1 // pred_fallthru
      _
    // Predicated region
    $region6: #{tpu_custom_call.1} parent=1 // pred_check
      _
    $region7: #{tpu_custom_call.1} parent=1 // pred_check_branch
      %15 = sbr.rel (0) target = $region9
    $region8: #{tpu_custom_call.1} parent=1 // pred_region
      _
    $region9: #{tpu_custom_call.1} parent=1 // pred_fallthru
      _
    // Predicated region
    $region10: #{tpu_custom_call.1} parent=1 // pred_check
      _
    $region11: #{tpu_custom_call.1} parent=1 // pred_check_branch
      %17 = sbr.rel (0) target = $region13
    $region12: #{tpu_custom_call.1} parent=1 // pred_region
      _
    $region13: #{tpu_custom_call.1} parent=1 // pred_fallthru
      _
    // Predicated region
    $region14: #{tpu_custom_call.1} parent=1 // pred_check
      _
    $region15: #{tpu_custom_call.1} parent=1 // pred_check_branch
      %19 = sbr.rel (0) target = $region17
    $region16: #{tpu_custom_call.1} parent=1 // pred_region
      %s21 = ssub.s32 2048, 2048
      %22 = vsyncadd [#allocation3], %s21
      %s23 = sshll.u32 [#allocation2], 4
      %s24 = int_to_ptr.vmem [resolvable:$true] %s23
      %29 = dma.hbm_to_vmem [thread:$0]  %s3, 2048, %s24, [#allocation3], 128, 128, 8
    $region17: #{tpu_custom_call.1} parent=1 // pred_fallthru
      _
    // Predicated region
    $region18: #{tpu_custom_call.1} parent=1 // pred_check
      _
    $region19: #{tpu_custom_call.1} parent=1 // pred_check_branch
      %31 = sbr.rel (0) target = $region21
    $region20: #{tpu_custom_call.1} parent=1 // pred_region
      _
    $region21: #{tpu_custom_call.1} parent=1 // pred_fallthru
      _
    // Predicated region
    $region22: #{tpu_custom_call.1} parent=1 // pred_check
      _
    $region23: #{tpu_custom_call.1} parent=1 // pred_check_branch
      %33 = sbr.rel (0) target = $region25
    $region24: #{tpu_custom_call.1} parent=1 // pred_region
      %34 = dma.done [#allocation3], 2048
    $region25: #{tpu_custom_call.1} parent=1 // pred_fallthru
      _
    %v35 = vld [vmem:[%s0] sm:$0xff]
    %v36 = vld [vmem:[%s0 + $0x8] sm:$0xff]
    %v37 = vld [vmem:[%s0 + $0x10] sm:$0xff]
    %v38 = vld [vmem:[%s0 + $0x18] sm:$0xff]
    %v39 = vld [vmem:[%s0 + $0x20] sm:$0xff]
    %v40 = vld [vmem:[%s0 + $0x28] sm:$0xff]
    %v41 = vld [vmem:[%s0 + $0x30] sm:$0xff]
    %v42 = vld [vmem:[%s0 + $0x38] sm:$0xff]
    %v43 = vld [vmem:[%s2] sm:$0x7]
    %v44 = vld [vmem:[%s1] sm:$0xff]
    %v45 = vld [vmem:[%s1 + $0x8] sm:$0xff]
    %v46 = vld [vmem:[%s1 + $0x10] sm:$0xff]
    %v47 = vld [vmem:[%s1 + $0x18] sm:$0xff]
    %v48 = vlaneseq
    %v49 = vshrl.u32 %v48, 7
    %v50 = vsub.s32 0, %v49
    %v51 = vrot.slane %v43, %v50
    %vm52 = vcmask 261120
    %v54 = vsel %vm52, %v35, 0
    %v57 = vsel %vm52, %v36, 0
    %v60 = vsel %vm52, %v37, 0
    %v63 = vsel %vm52, %v38, 0
    %v66 = vsel %vm52, %v39, 0
    %v69 = vsel %vm52, %v40, 0
    %v72 = vsel %vm52, %v41, 0
    %v75 = vsel %vm52, %v42, 0
    %77 = vmatprep.subr.mxu0 0.0
    %78 = vmatpush1.msra.mxu0 0.0
    %79 = vmatprep.subr.mxu0 0.0
    %80 = vmatpush1.msra.mxu0 0.0
    %81 = vmatprep.subr.mxu0 0.0
    %82 = vmatpush1.msra.mxu0 0.0
    %83 = vmatprep.subr.mxu0 0.0
    %84 = vmatpush1.msra.mxu0 0.0
    %85 = vmatprep.subr.mxu0 0.0
    %86 = vmatpush1.msra.mxu0 0.0
    %87 = vmatprep.subr.mxu0 0.0
    %88 = vmatpush1.msra.mxu0 0.0
    %89 = vmatprep.subr.mxu0 0.0
    %90 = vmatpush1.msra.mxu0 0.0
    %91 = vmatprep.subr.mxu0 0.0
    %92 = vmatpush1.msra.mxu0 0.0
    %93 = vmatprep.subr.mxu0 0.0
    %94 = vmatpush1.msra.mxu0 0.0
    %95 = vmatprep.subr.mxu0 0.0
    %96 = vmatpush1.msra.mxu0 0.0
    %97 = vmatprep.subr.mxu0 0.0
    %98 = vmatpush1.msra.mxu0 0.0
    %99 = vmatprep.subr.mxu0 0.0
    %100 = vmatpush1.msra.mxu0 0.0
    %101 = vmatprep.subr.mxu0 0.0
    %102 = vmatpush1.msra.mxu0 %v47
    %103 = vmatprep.subr.mxu0 0.0
    %104 = vmatpush1.msra.mxu0 %v46
    %105 = vmatprep.subr.mxu0 0.0
    %106 = vmatpush1.msra.mxu0 %v45
    %107 = vmatprep.subr.mxu0 0.0
    %108 = vmatpush1.msra.mxu0 %v44
    %109 = vmatprep.subr.mxu0 0.0
    %110 = vmatpush2.msra.mxu0 0.0
    %111 = vmatprep.subr.mxu0 0.0
    %112 = vmatpush2.msra.mxu0 0.0
    %113 = vmatprep.subr.mxu0 0.0
    %114 = vmatpush2.msra.mxu0 0.0
    %115 = vmatprep.subr.mxu0 0.0
    %116 = vmatpush2.msra.mxu0 0.0
    %117 = vmatprep.subr.mxu0 0.0
    %118 = vmatpush2.msra.mxu0 0.0
    %119 = vmatprep.subr.mxu0 0.0
    %120 = vmatpush2.msra.mxu0 0.0
    %121 = vmatprep.subr.mxu0 0.0
    %122 = vmatpush2.msra.mxu0 0.0
    %123 = vmatprep.subr.mxu0 0.0
    %124 = vmatpush2.msra.mxu0 0.0
    %125 = vmatprep.subr.mxu0 0.0
    %126 = vmatpush2.msra.mxu0 0.0
    %127 = vmatprep.subr.mxu0 0.0
    %128 = vmatpush2.msra.mxu0 0.0
    %129 = vmatprep.subr.mxu0 0.0
    %130 = vmatpush2.msra.mxu0 0.0
    %131 = vmatprep.subr.mxu0 0.0
    %132 = vmatpush2.msra.mxu0 0.0
    %133 = vmatprep.subr.mxu0 0.0
    %134 = vmatpush2.msra.mxu0 0.0
    %135 = vmatprep.subr.mxu0 0.0
    %136 = vmatpush2.msra.mxu0 0.0
    %137 = vmatprep.subr.mxu0 0.0
    %138 = vmatpush2.msra.mxu0 0.0
    %139 = vmatprep.subr.mxu0 0.0
    %140 = vmatpush2.msra.mxu0 0.0
    %141 = vmatprep.mubr.f32.mxu0 0.0
    %142 = vmatmul.mubr.f32.gmra.mxu0 %v54
    %v143 = vpop.f32.mrf.mxu0
    %v144 = vadd.f32 %v51, %v143
    %v145 = vpop.f32.mrf.mxu0
    %146 = vmatprep.mubr.f32.mxu0 0.0
    %147 = vmatmul.mubr.f32.gmra.mxu0 %v57
    %v148 = vpop.f32.mrf.mxu0
    %v149 = vadd.f32 %v51, %v148
    %v150 = vpop.f32.mrf.mxu0
    %151 = vmatprep.mubr.f32.mxu0 0.0
    %152 = vmatmul.mubr.f32.gmra.mxu0 %v60
    %v153 = vpop.f32.mrf.mxu0
    %v154 = vadd.f32 %v51, %v153
    %v155 = vpop.f32.mrf.mxu0
    %156 = vmatprep.mubr.f32.mxu0 0.0
    %157 = vmatmul.mubr.f32.gmra.mxu0 %v63
    %v158 = vpop.f32.mrf.mxu0
    %v159 = vadd.f32 %v51, %v158
    %v160 = vpop.f32.mrf.mxu0
    %161 = vmatprep.mubr.f32.mxu0 0.0
    %162 = vmatmul.mubr.f32.gmra.mxu0 %v66
    %v163 = vpop.f32.mrf.mxu0
    %v164 = vadd.f32 %v51, %v163
    %v165 = vpop.f32.mrf.mxu0
    %166 = vmatprep.mubr.f32.mxu0 0.0
    %167 = vmatmul.mubr.f32.gmra.mxu0 %v69
    %v168 = vpop.f32.mrf.mxu0
    %v169 = vadd.f32 %v51, %v168
    %v170 = vpop.f32.mrf.mxu0
    %171 = vmatprep.mubr.f32.mxu0 0.0
    %172 = vmatmul.mubr.f32.gmra.mxu0 %v72
    %v173 = vpop.f32.mrf.mxu0
    %v174 = vadd.f32 %v51, %v173
    %v175 = vpop.f32.mrf.mxu0
    %176 = vmatprep.mubr.f32.mxu0 0.0
    %177 = vmatmul.mubr.f32.gmra.mxu0 %v75
    %v178 = vpop.f32.mrf.mxu0
    %v179 = vadd.f32 %v51, %v178
    %v180 = vpop.f32.mrf.mxu0
    %181 = vdwg.mxu0
    %182 = vxpose.xlu0.b32.start [1/16] %v144, 128
    %183 = vxpose.xlu0.b32.cont [2/16] %v149, 128
    %184 = vxpose.xlu0.b32.cont [3/16] %v154, 128
    %185 = vxpose.xlu0.b32.cont [4/16] %v159, 128
    %186 = vxpose.xlu0.b32.cont [5/16] %v164, 128
    %187 = vxpose.xlu0.b32.cont [6/16] %v169, 128
    %188 = vxpose.xlu0.b32.cont [7/16] %v174, 128
    %189 = vxpose.xlu0.b32.cont [8/16] %v179, 128
    %190 = vxpose.xlu0.b32.cont [9/16] 0.0, 128
    %191 = vxpose.xlu0.b32.cont [10/16] 0.0, 128
    %192 = vxpose.xlu0.b32.cont [11/16] 0.0, 128
    %193 = vxpose.xlu0.b32.cont [12/16] 0.0, 128
    %194 = vxpose.xlu0.b32.cont [13/16] 0.0, 128
    %195 = vxpose.xlu0.b32.cont [14/16] 0.0, 128
    %196 = vxpose.xlu0.b32.cont [15/16] 0.0, 128
    %197 = vxpose.xlu0.b32.end [16/16] 0.0, 128
    %v198 = vpop.trf.xlu0
    %v199 = vpop.trf.xlu0
    %v200 = vpop.trf.xlu0
    %v201 = vpop.trf.xlu0
    %v202 = vpop.trf.xlu0
    %v203 = vpop.trf.xlu0
    %v204 = vpop.trf.xlu0
    %v205 = vpop.trf.xlu0
    %v206 = vpop.trf.xlu0
    %v207 = vpop.trf.xlu0
    %v208 = vpop.trf.xlu0
    %v209 = vpop.trf.xlu0
    %v210 = vpop.trf.xlu0
    %v211 = vpop.trf.xlu0
    %v212 = vpop.trf.xlu0
    %v213 = vpop.trf.xlu0
    %vm214 = vcmask 523264
    %v216 = vsel %vm214, %v198, 0
    %v219 = vsel %vm214, %v199, 0
    %v222 = vsel %vm214, %v200, 0
    %v225 = vsel %vm214, %v201, 0
    %v228 = vsel %vm214, %v202, 0
    %v231 = vsel %vm214, %v203, 0
    %v234 = vsel %vm214, %v204, 0
    %v237 = vsel %vm214, %v205, 0
    %v240 = vsel %vm214, %v206, 0
    %v243 = vsel %vm214, %v207, 0
    %v246 = vsel %vm214, %v208, 0
    %v249 = vsel %vm214, %v209, 0
    %v252 = vsel %vm214, %v210, 0
    %v255 = vsel %vm214, %v211, 0
    %v258 = vsel %vm214, %v212, 0
    %v261 = vsel %vm214, %v213, 0
    %263 = vmatprep.subr.mxu0 0.0
    %264 = vmatpush1.msra.mxu0 0.0
    %265 = vmatprep.subr.mxu0 0.0
    %266 = vmatpush1.msra.mxu0 0.0
    %267 = vmatprep.subr.mxu0 0.0
    %268 = vmatpush1.msra.mxu0 0.0
    %269 = vmatprep.subr.mxu0 0.0
    %270 = vmatpush1.msra.mxu0 0.0
    %271 = vmatprep.subr.mxu0 0.0
    %272 = vmatpush1.msra.mxu0 0.0
    %273 = vmatprep.subr.mxu0 0.0
    %274 = vmatpush1.msra.mxu0 0.0
    %275 = vmatprep.subr.mxu0 0.0
    %276 = vmatpush1.msra.mxu0 0.0
    %277 = vmatprep.subr.mxu0 0.0
    %278 = vmatpush1.msra.mxu0 0.0
    %279 = vmatprep.subr.mxu0 0.0
    %280 = vmatpush1.msra.mxu0 %v179
    %281 = vmatprep.subr.mxu0 0.0
    %282 = vmatpush1.msra.mxu0 %v174
    %283 = vmatprep.subr.mxu0 0.0
    %284 = vmatpush1.msra.mxu0 %v169
    %285 = vmatprep.subr.mxu0 0.0
    %286 = vmatpush1.msra.mxu0 %v164
    %287 = vmatprep.subr.mxu0 0.0
    %288 = vmatpush1.msra.mxu0 %v159
    %289 = vmatprep.subr.mxu0 0.0
    %290 = vmatpush1.msra.mxu0 %v154
    %291 = vmatprep.subr.mxu0 0.0
    %292 = vmatpush1.msra.mxu0 %v149
    %293 = vmatprep.subr.mxu0 0.0
    %294 = vmatpush1.msra.mxu0 %v144
    %295 = vmatprep.subr.mxu0 0.0
    %296 = vmatpush2.msra.mxu0 0.0
    %297 = vmatprep.subr.mxu0 0.0
    %298 = vmatpush2.msra.mxu0 0.0
    %299 = vmatprep.subr.mxu0 0.0
    %300 = vmatpush2.msra.mxu0 0.0
    %301 = vmatprep.subr.mxu0 0.0
    %302 = vmatpush2.msra.mxu0 0.0
    %303 = vmatprep.subr.mxu0 0.0
    %304 = vmatpush2.msra.mxu0 0.0
    %305 = vmatprep.subr.mxu0 0.0
    %306 = vmatpush2.msra.mxu0 0.0
    %307 = vmatprep.subr.mxu0 0.0
    %308 = vmatpush2.msra.mxu0 0.0
    %309 = vmatprep.subr.mxu0 0.0
    %310 = vmatpush2.msra.mxu0 0.0
    %311 = vmatprep.subr.mxu0 0.0
    %312 = vmatpush2.msra.mxu0 0.0
    %313 = vmatprep.subr.mxu0 0.0
    %314 = vmatpush2.msra.mxu0 0.0
    %315 = vmatprep.subr.mxu0 0.0
    %316 = vmatpush2.msra.mxu0 0.0
    %317 = vmatprep.subr.mxu0 0.0
    %318 = vmatpush2.msra.mxu0 0.0
    %319 = vmatprep.subr.mxu0 0.0
    %320 = vmatpush2.msra.mxu0 0.0
    %321 = vmatprep.subr.mxu0 0.0
    %322 = vmatpush2.msra.mxu0 0.0
    %323 = vmatprep.subr.mxu0 0.0
    %324 = vmatpush2.msra.mxu0 0.0
    %325 = vmatprep.subr.mxu0 0.0
    %326 = vmatpush2.msra.mxu0 0.0
    %327 = vmatprep.mubr.f32.mxu0 0.0
    %328 = vmatmul.mubr.f32.gmra.mxu0 %v216
    %v329 = vpop.f32.mrf.mxu0
    %v330 = vadd.f32 0.0, %v329
    %v331 = vpop.f32.mrf.mxu0
    %332 = vmatprep.mubr.f32.mxu0 0.0
    %333 = vmatmul.mubr.f32.gmra.mxu0 %v219
    %v334 = vpop.f32.mrf.mxu0
    %v335 = vadd.f32 0.0, %v334
    %v336 = vpop.f32.mrf.mxu0
    %337 = vmatprep.mubr.f32.mxu0 0.0
    %338 = vmatmul.mubr.f32.gmra.mxu0 %v222
    %v339 = vpop.f32.mrf.mxu0
    %v340 = vadd.f32 0.0, %v339
    %v341 = vpop.f32.mrf.mxu0
    %342 = vmatprep.mubr.f32.mxu0 0.0
    %343 = vmatmul.mubr.f32.gmra.mxu0 %v225
    %v344 = vpop.f32.mrf.mxu0
    %v345 = vadd.f32 0.0, %v344
    %v346 = vpop.f32.mrf.mxu0
    %347 = vmatprep.mubr.f32.mxu0 0.0
    %348 = vmatmul.mubr.f32.gmra.mxu0 %v228
    %v349 = vpop.f32.mrf.mxu0
    %v350 = vadd.f32 0.0, %v349
    %v351 = vpop.f32.mrf.mxu0
    %352 = vmatprep.mubr.f32.mxu0 0.0
    %353 = vmatmul.mubr.f32.gmra.mxu0 %v231
    %v354 = vpop.f32.mrf.mxu0
    %v355 = vadd.f32 0.0, %v354
    %v356 = vpop.f32.mrf.mxu0
    %357 = vmatprep.mubr.f32.mxu0 0.0
    %358 = vmatmul.mubr.f32.gmra.mxu0 %v234
    %v359 = vpop.f32.mrf.mxu0
    %v360 = vadd.f32 0.0, %v359
    %v361 = vpop.f32.mrf.mxu0
    %362 = vmatprep.mubr.f32.mxu0 0.0
    %363 = vmatmul.mubr.f32.gmra.mxu0 %v237
    %v364 = vpop.f32.mrf.mxu0
    %v365 = vadd.f32 0.0, %v364
    %v366 = vpop.f32.mrf.mxu0
    %367 = vmatprep.mubr.f32.mxu0 0.0
    %368 = vmatmul.mubr.f32.gmra.mxu0 %v240
    %v369 = vpop.f32.mrf.mxu0
    %v370 = vadd.f32 0.0, %v369
    %v371 = vpop.f32.mrf.mxu0
    %372 = vmatprep.mubr.f32.mxu0 0.0
    %373 = vmatmul.mubr.f32.gmra.mxu0 %v243
    %v374 = vpop.f32.mrf.mxu0
    %v375 = vadd.f32 0.0, %v374
    %v376 = vpop.f32.mrf.mxu0
    %377 = vmatprep.mubr.f32.mxu0 0.0
    %378 = vmatmul.mubr.f32.gmra.mxu0 %v246
    %v379 = vpop.f32.mrf.mxu0
    %v380 = vadd.f32 0.0, %v379
    %v381 = vpop.f32.mrf.mxu0
    %382 = vmatprep.mubr.f32.mxu0 0.0
    %383 = vmatmul.mubr.f32.gmra.mxu0 %v249
    %v384 = vpop.f32.mrf.mxu0
    %v385 = vadd.f32 0.0, %v384
    %v386 = vpop.f32.mrf.mxu0
    %387 = vmatprep.mubr.f32.mxu0 0.0
    %388 = vmatmul.mubr.f32.gmra.mxu0 %v252
    %v389 = vpop.f32.mrf.mxu0
    %v390 = vadd.f32 0.0, %v389
    %v391 = vpop.f32.mrf.mxu0
    %392 = vmatprep.mubr.f32.mxu0 0.0
    %393 = vmatmul.mubr.f32.gmra.mxu0 %v255
    %v394 = vpop.f32.mrf.mxu0
    %v395 = vadd.f32 0.0, %v394
    %v396 = vpop.f32.mrf.mxu0
    %397 = vmatprep.mubr.f32.mxu0 0.0
    %398 = vmatmul.mubr.f32.gmra.mxu0 %v258
    %v399 = vpop.f32.mrf.mxu0
    %v400 = vadd.f32 0.0, %v399
    %v401 = vpop.f32.mrf.mxu0
    %402 = vmatprep.mubr.f32.mxu0 0.0
    %403 = vmatmul.mubr.f32.gmra.mxu0 %v261
    %v404 = vpop.f32.mrf.mxu0
    %v405 = vadd.f32 0.0, %v404
    %v406 = vpop.f32.mrf.mxu0
    %407 = vdwg.mxu0
    %408 = vmax.xlane.f32.xlu0 %v330
    %v409 = vpop.xlane.xlu0 %408
    %410 = vmax.xlane.f32.xlu0 %v335
    %v411 = vpop.xlane.xlu0 %410
    %412 = vmax.xlane.f32.xlu0 %v340
    %v413 = vpop.xlane.xlu0 %412
    %414 = vmax.xlane.f32.xlu0 %v345
    %v415 = vpop.xlane.xlu0 %414
    %416 = vmax.xlane.f32.xlu0 %v350
    %v417 = vpop.xlane.xlu0 %416
    %418 = vmax.xlane.f32.xlu0 %v355
    %v419 = vpop.xlane.xlu0 %418
    %420 = vmax.xlane.f32.xlu0 %v360
    %v421 = vpop.xlane.xlu0 %420
    %422 = vmax.xlane.f32.xlu0 %v365
    %v423 = vpop.xlane.xlu0 %422
    %424 = vmax.xlane.f32.xlu0 %v370
    %v425 = vpop.xlane.xlu0 %424
    %426 = vmax.xlane.f32.xlu0 %v375
    %v427 = vpop.xlane.xlu0 %426
    %428 = vmax.xlane.f32.xlu0 %v380
    %v429 = vpop.xlane.xlu0 %428
    %430 = vmax.xlane.f32.xlu0 %v385
    %v431 = vpop.xlane.xlu0 %430
    %432 = vmax.xlane.f32.xlu0 %v390
    %v433 = vpop.xlane.xlu0 %432
    %434 = vmax.xlane.f32.xlu0 %v395
    %v435 = vpop.xlane.xlu0 %434
    %436 = vmax.xlane.f32.xlu0 %v400
    %v437 = vpop.xlane.xlu0 %436
    %438 = vmax.xlane.f32.xlu0 %v405
    %v439 = vpop.xlane.xlu0 %438
    %v440 = vsub.f32 %v330, %v409
    %v441 = vsub.f32 %v335, %v411
    %v442 = vsub.f32 %v340, %v413
    %v443 = vsub.f32 %v345, %v415
    %v444 = vsub.f32 %v350, %v417
    %v445 = vsub.f32 %v355, %v419
    %v446 = vsub.f32 %v360, %v421
    %v447 = vsub.f32 %v365, %v423
    %v448 = vsub.f32 %v370, %v425
    %v449 = vsub.f32 %v375, %v427
    %v450 = vsub.f32 %v380, %v429
    %v451 = vsub.f32 %v385, %v431
    %v452 = vsub.f32 %v390, %v433
    %v453 = vsub.f32 %v395, %v435
    %v454 = vsub.f32 %v400, %v437
    %v455 = vsub.f32 %v405, %v439
    %v456 = vmul.f32 %v440, 1.442695
    %v457 = vpow.pop %v456
    %v458 = vmul.f32 %v441, 1.442695
    %v459 = vpow.pop %v458
    %v460 = vmul.f32 %v442, 1.442695
    %v461 = vpow.pop %v460
    %v462 = vmul.f32 %v443, 1.442695
    %v463 = vpow.pop %v462
    %v464 = vmul.f32 %v444, 1.442695
    %v465 = vpow.pop %v464
    %v466 = vmul.f32 %v445, 1.442695
    %v467 = vpow.pop %v466
    %v468 = vmul.f32 %v446, 1.442695
    %v469 = vpow.pop %v468
    %v470 = vmul.f32 %v447, 1.442695
    %v471 = vpow.pop %v470
    %v472 = vmul.f32 %v448, 1.442695
    %v473 = vpow.pop %v472
    %v474 = vmul.f32 %v449, 1.442695
    %v475 = vpow.pop %v474
    %v476 = vmul.f32 %v450, 1.442695
    %v477 = vpow.pop %v476
    %v478 = vmul.f32 %v451, 1.442695
    %v479 = vpow.pop %v478
    %v480 = vmul.f32 %v452, 1.442695
    %v481 = vpow.pop %v480
    %v482 = vmul.f32 %v453, 1.442695
    %v483 = vpow.pop %v482
    %v484 = vmul.f32 %v454, 1.442695
    %v485 = vpow.pop %v484
    %v486 = vmul.f32 %v455, 1.442695
    %v487 = vpow.pop %v486
    %488 = vadd.xlane.f32.xlu0 %v457
    %v489 = vpop.xlane.xlu0 %488
    %490 = vadd.xlane.f32.xlu0 %v459
    %v491 = vpop.xlane.xlu0 %490
    %492 = vadd.xlane.f32.xlu0 %v461
    %v493 = vpop.xlane.xlu0 %492
    %494 = vadd.xlane.f32.xlu0 %v463
    %v495 = vpop.xlane.xlu0 %494
    %496 = vadd.xlane.f32.xlu0 %v465
    %v497 = vpop.xlane.xlu0 %496
    %498 = vadd.xlane.f32.xlu0 %v467
    %v499 = vpop.xlane.xlu0 %498
    %500 = vadd.xlane.f32.xlu0 %v469
    %v501 = vpop.xlane.xlu0 %500
    %502 = vadd.xlane.f32.xlu0 %v471
    %v503 = vpop.xlane.xlu0 %502
    %504 = vadd.xlane.f32.xlu0 %v473
    %v505 = vpop.xlane.xlu0 %504
    %506 = vadd.xlane.f32.xlu0 %v475
    %v507 = vpop.xlane.xlu0 %506
    %508 = vadd.xlane.f32.xlu0 %v477
    %v509 = vpop.xlane.xlu0 %508
    %510 = vadd.xlane.f32.xlu0 %v479
    %v511 = vpop.xlane.xlu0 %510
    %512 = vadd.xlane.f32.xlu0 %v481
    %v513 = vpop.xlane.xlu0 %512
    %514 = vadd.xlane.f32.xlu0 %v483
    %v515 = vpop.xlane.xlu0 %514
    %516 = vadd.xlane.f32.xlu0 %v485
    %v517 = vpop.xlane.xlu0 %516
    %518 = vadd.xlane.f32.xlu0 %v487
    %v519 = vpop.xlane.xlu0 %518
    %v520 = vrcp.pop %v489
    %v521 = vmul.f32 %v457, %v520
    %v522 = vrcp.pop %v491
    %v523 = vmul.f32 %v459, %v522
    %v524 = vrcp.pop %v493
    %v525 = vmul.f32 %v461, %v524
    %v526 = vrcp.pop %v495
    %v527 = vmul.f32 %v463, %v526
    %v528 = vrcp.pop %v497
    %v529 = vmul.f32 %v465, %v528
    %v530 = vrcp.pop %v499
    %v531 = vmul.f32 %v467, %v530
    %v532 = vrcp.pop %v501
    %v533 = vmul.f32 %v469, %v532
    %v534 = vrcp.pop %v503
    %v535 = vmul.f32 %v471, %v534
    %v536 = vrcp.pop %v505
    %v537 = vmul.f32 %v473, %v536
    %v538 = vrcp.pop %v507
    %v539 = vmul.f32 %v475, %v538
    %v540 = vrcp.pop %v509
    %v541 = vmul.f32 %v477, %v540
    %v542 = vrcp.pop %v511
    %v543 = vmul.f32 %v479, %v542
    %v544 = vrcp.pop %v513
    %v545 = vmul.f32 %v481, %v544
    %v546 = vrcp.pop %v515
    %v547 = vmul.f32 %v483, %v546
    %v548 = vrcp.pop %v517
    %v549 = vmul.f32 %v485, %v548
    %v550 = vrcp.pop %v519
    %v551 = vmul.f32 %v487, %v550
    %v552 = vmul.f32 %v144, 1.2
    %v553 = vmul.f32 %v149, 1.2
    %v554 = vmul.f32 %v154, 1.2
    %v555 = vmul.f32 %v159, 1.2
    %v556 = vmul.f32 %v164, 1.2
    %v557 = vmul.f32 %v169, 1.2
    %v558 = vmul.f32 %v174, 1.2
    %v559 = vmul.f32 %v179, 1.2
    %560 = vmatprep.subr.mxu0 0.0
    %561 = vmatpush1.msra.mxu0 %v551
    %562 = vmatprep.subr.mxu0 0.0
    %563 = vmatpush1.msra.mxu0 %v549
    %564 = vmatprep.subr.mxu0 0.0
    %565 = vmatpush1.msra.mxu0 %v547
    %566 = vmatprep.subr.mxu0 0.0
    %567 = vmatpush1.msra.mxu0 %v545
    %568 = vmatprep.subr.mxu0 0.0
    %569 = vmatpush1.msra.mxu0 %v543
    %570 = vmatprep.subr.mxu0 0.0
    %571 = vmatpush1.msra.mxu0 %v541
    %572 = vmatprep.subr.mxu0 0.0
    %573 = vmatpush1.msra.mxu0 %v539
    %574 = vmatprep.subr.mxu0 0.0
    %575 = vmatpush1.msra.mxu0 %v537
    %576 = vmatprep.subr.mxu0 0.0
    %577 = vmatpush1.msra.mxu0 %v535
    %578 = vmatprep.subr.mxu0 0.0
    %579 = vmatpush1.msra.mxu0 %v533
    %580 = vmatprep.subr.mxu0 0.0
    %581 = vmatpush1.msra.mxu0 %v531
    %582 = vmatprep.subr.mxu0 0.0
    %583 = vmatpush1.msra.mxu0 %v529
    %584 = vmatprep.subr.mxu0 0.0
    %585 = vmatpush1.msra.mxu0 %v527
    %586 = vmatprep.subr.mxu0 0.0
    %587 = vmatpush1.msra.mxu0 %v525
    %588 = vmatprep.subr.mxu0 0.0
    %589 = vmatpush1.msra.mxu0 %v523
    %590 = vmatprep.subr.mxu0 0.0
    %591 = vmatpush1.msra.mxu0 %v521
    %592 = vmatprep.subr.mxu0 0.0
    %593 = vmatpush2.msra.mxu0 0.0
    %594 = vmatprep.subr.mxu0 0.0
    %595 = vmatpush2.msra.mxu0 0.0
    %596 = vmatprep.subr.mxu0 0.0
    %597 = vmatpush2.msra.mxu0 0.0
    %598 = vmatprep.subr.mxu0 0.0
    %599 = vmatpush2.msra.mxu0 0.0
    %600 = vmatprep.subr.mxu0 0.0
    %601 = vmatpush2.msra.mxu0 0.0
    %602 = vmatprep.subr.mxu0 0.0
    %603 = vmatpush2.msra.mxu0 0.0
    %604 = vmatprep.subr.mxu0 0.0
    %605 = vmatpush2.msra.mxu0 0.0
    %606 = vmatprep.subr.mxu0 0.0
    %607 = vmatpush2.msra.mxu0 0.0
    %608 = vmatprep.subr.mxu0 0.0
    %609 = vmatpush2.msra.mxu0 0.0
    %610 = vmatprep.subr.mxu0 0.0
    %611 = vmatpush2.msra.mxu0 0.0
    %612 = vmatprep.subr.mxu0 0.0
    %613 = vmatpush2.msra.mxu0 0.0
    %614 = vmatprep.subr.mxu0 0.0
    %615 = vmatpush2.msra.mxu0 0.0
    %616 = vmatprep.subr.mxu0 0.0
    %617 = vmatpush2.msra.mxu0 0.0
    %618 = vmatprep.subr.mxu0 0.0
    %619 = vmatpush2.msra.mxu0 0.0
    %620 = vmatprep.subr.mxu0 0.0
    %621 = vmatpush2.msra.mxu0 0.0
    %622 = vmatprep.subr.mxu0 0.0
    %623 = vmatpush2.msra.mxu0 0.0
    %624 = vmatprep.mubr.f32.mxu0 0.0
    %625 = vmatmul.mubr.f32.gmra.mxu0 %v144
    %v626 = vpop.f32.mrf.mxu0
    %v627 = vadd.f32 0.0, %v626
    %v628 = vpop.f32.mrf.mxu0
    %629 = vmatprep.mubr.f32.mxu0 0.0
    %630 = vmatmul.mubr.f32.gmra.mxu0 %v149
    %v631 = vpop.f32.mrf.mxu0
    %v632 = vadd.f32 0.0, %v631
    %v633 = vpop.f32.mrf.mxu0
    %634 = vmatprep.mubr.f32.mxu0 0.0
    %635 = vmatmul.mubr.f32.gmra.mxu0 %v154
    %v636 = vpop.f32.mrf.mxu0
    %v637 = vadd.f32 0.0, %v636
    %v638 = vpop.f32.mrf.mxu0
    %639 = vmatprep.mubr.f32.mxu0 0.0
    %640 = vmatmul.mubr.f32.gmra.mxu0 %v159
    %v641 = vpop.f32.mrf.mxu0
    %v642 = vadd.f32 0.0, %v641
    %v643 = vpop.f32.mrf.mxu0
    %644 = vmatprep.mubr.f32.mxu0 0.0
    %645 = vmatmul.mubr.f32.gmra.mxu0 %v164
    %v646 = vpop.f32.mrf.mxu0
    %v647 = vadd.f32 0.0, %v646
    %v648 = vpop.f32.mrf.mxu0
    %649 = vmatprep.mubr.f32.mxu0 0.0
    %650 = vmatmul.mubr.f32.gmra.mxu0 %v169
    %v651 = vpop.f32.mrf.mxu0
    %v652 = vadd.f32 0.0, %v651
    %v653 = vpop.f32.mrf.mxu0
    %654 = vmatprep.mubr.f32.mxu0 0.0
    %655 = vmatmul.mubr.f32.gmra.mxu0 %v174
    %v656 = vpop.f32.mrf.mxu0
    %v657 = vadd.f32 0.0, %v656
    %v658 = vpop.f32.mrf.mxu0
    %659 = vmatprep.mubr.f32.mxu0 0.0
    %660 = vmatmul.mubr.f32.gmra.mxu0 %v179
    %v661 = vpop.f32.mrf.mxu0
    %v662 = vadd.f32 0.0, %v661
    %v663 = vpop.f32.mrf.mxu0
    %664 = vdwg.mxu0
    %v665 = vmul.f32 %v627, 0.2
    %v666 = vmul.f32 %v632, 0.2
    %v667 = vmul.f32 %v637, 0.2
    %v668 = vmul.f32 %v642, 0.2
    %v669 = vmul.f32 %v647, 0.2
    %v670 = vmul.f32 %v652, 0.2
    %v671 = vmul.f32 %v657, 0.2
    %v672 = vmul.f32 %v662, 0.2
    %v673 = vsub.f32 %v552, %v665
    %v674 = vsub.f32 %v553, %v666
    %v675 = vsub.f32 %v554, %v667
    %v676 = vsub.f32 %v555, %v668
    %v677 = vsub.f32 %v556, %v669
    %v678 = vsub.f32 %v557, %v670
    %v679 = vsub.f32 %v558, %v671
    %v680 = vsub.f32 %v559, %v672
    %v681 = vadd.f32 %v673, %v674
    %v682 = vadd.f32 %v681, %v675
    %v683 = vadd.f32 %v682, %v676
    %v684 = vadd.f32 %v683, %v677
    %v685 = vadd.f32 %v684, %v678
    %v686 = vadd.f32 %v685, %v679
    %v687 = vadd.f32 %v686, %v680
    %v688 = vrot.slane %v687, 4
    %v689 = vadd.f32 %v687, %v688
    %v690 = vrot.slane %v689, 2
    %v691 = vadd.f32 %v689, %v690
    %v692 = vrot.slane %v691, 1
    %v693 = vadd.f32 %v691, %v692
    %v694 = vrcp.pop 64.0
    %v695 = vmul.f32 %v693, %v694
    %v696 = vsub.f32 %v673, %v695
    %v697 = vsub.f32 %v674, %v695
    %v698 = vsub.f32 %v675, %v695
    %v699 = vsub.f32 %v676, %v695
    %v700 = vsub.f32 %v677, %v695
    %v701 = vsub.f32 %v678, %v695
    %v702 = vsub.f32 %v679, %v695
    %v703 = vsub.f32 %v680, %v695
    %v704 = vmul.f32 %v696, %v696
    %v705 = vmul.f32 %v697, %v697
    %v706 = vmul.f32 %v698, %v698
    %v707 = vmul.f32 %v699, %v699
    %v708 = vmul.f32 %v700, %v700
    %v709 = vmul.f32 %v701, %v701
    %v710 = vmul.f32 %v702, %v702
    %v711 = vmul.f32 %v703, %v703
    %v712 = vadd.f32 %v704, %v705
    %v713 = vadd.f32 %v712, %v706
    %v714 = vadd.f32 %v713, %v707
    %v715 = vadd.f32 %v714, %v708
    %v716 = vadd.f32 %v715, %v709
    %v717 = vadd.f32 %v716, %v710
    %v718 = vadd.f32 %v717, %v711
    %v719 = vrot.slane %v718, 4
    %v720 = vadd.f32 %v718, %v719
    %v721 = vrot.slane %v720, 2
    %v722 = vadd.f32 %v720, %v721
    %v723 = vrot.slane %v722, 1
    %v724 = vadd.f32 %v722, %v723
    %v725 = vmul.f32 %v724, %v694
    %v726 = vadd.f32 %v725, 1e-05
    %v727 = vrsqrt.pop %v726
    %v728 = vmul.f32 %v696, %v727
    %v729 = vmul.f32 %v697, %v727
    %v730 = vmul.f32 %v698, %v727
    %v731 = vmul.f32 %v699, %v727
    %v732 = vmul.f32 %v700, %v727
    %v733 = vmul.f32 %v701, %v727
    %v734 = vmul.f32 %v702, %v727
    %v735 = vmul.f32 %v703, %v727
    %v736 = vlaneseq
    %v737 = vshrl.u32 %v736, 7
    %v738 = vsub.s32 1, %v737
    %v739 = vrot.slane %v43, %v738
    %v740 = vmul.f32 %v728, %v739
    %v741 = vmul.f32 %v729, %v739
    %v742 = vmul.f32 %v730, %v739
    %v743 = vmul.f32 %v731, %v739
    %v744 = vmul.f32 %v732, %v739
    %v745 = vmul.f32 %v733, %v739
    %v746 = vmul.f32 %v734, %v739
    %v747 = vmul.f32 %v735, %v739
    %v748 = vlaneseq
    %v749 = vshrl.u32 %v748, 7
    %v750 = vsub.s32 2, %v749
    %v751 = vrot.slane %v43, %v750
    %v752 = vadd.f32 %v740, %v751
    %v753 = vadd.f32 %v741, %v751
    %v754 = vadd.f32 %v742, %v751
    %v755 = vadd.f32 %v743, %v751
    %v756 = vadd.f32 %v744, %v751
    %v757 = vadd.f32 %v745, %v751
    %v758 = vadd.f32 %v746, %v751
    %v759 = vadd.f32 %v747, %v751
    %v760 = vmax.f32 %v752, 0.0
    %v761 = vmax.f32 %v753, 0.0
    %v762 = vmax.f32 %v754, 0.0
    %v763 = vmax.f32 %v755, 0.0
    %v764 = vmax.f32 %v756, 0.0
    %v765 = vmax.f32 %v757, 0.0
    %v766 = vmax.f32 %v758, 0.0
    %v767 = vmax.f32 %v759, 0.0
    %v768 = vld [vmem:[%s4] sm:$0x7]
    %v769 = vld [vmem:[#allocation2] sm:$0xff]
    %v770 = vld [vmem:[#allocation2 + $0x8] sm:$0xff]
    %v771 = vld [vmem:[#allocation2 + $0x10] sm:$0xff]
    %v772 = vld [vmem:[#allocation2 + $0x18] sm:$0xff]
    %v773 = vld [vmem:[#allocation2 + $0x20] sm:$0xff]
    %v774 = vld [vmem:[#allocation2 + $0x28] sm:$0xff]
    %v775 = vld [vmem:[#allocation2 + $0x30] sm:$0xff]
    %v776 = vld [vmem:[#allocation2 + $0x38] sm:$0xff]
    %v777 = vld [vmem:[#allocation2 + $0x40] sm:$0xff]
    %v778 = vld [vmem:[#allocation2 + $0x48] sm:$0xff]
    %v779 = vld [vmem:[#allocation2 + $0x50] sm:$0xff]
    %v780 = vld [vmem:[#allocation2 + $0x58] sm:$0xff]
    %v781 = vld [vmem:[#allocation2 + $0x60] sm:$0xff]
    %v782 = vld [vmem:[#allocation2 + $0x68] sm:$0xff]
    %v783 = vld [vmem:[#allocation2 + $0x70] sm:$0xff]
    %v784 = vld [vmem:[#allocation2 + $0x78] sm:$0xff]
    %v785 = vlaneseq
    %v786 = vshrl.u32 %v785, 7
    %v787 = vsub.s32 0, %v786
    %v788 = vrot.slane %v768, %v787
    %789 = vmatprep.subr.mxu0 0.0
    %790 = vmatpush1.msra.mxu0 %v784
    %791 = vmatprep.subr.mxu0 0.0
    %792 = vmatpush1.msra.mxu0 %v783
    %793 = vmatprep.subr.mxu0 0.0
    %794 = vmatpush1.msra.mxu0 %v782
    %795 = vmatprep.subr.mxu0 0.0
    %796 = vmatpush1.msra.mxu0 %v781
    %797 = vmatprep.subr.mxu0 0.0
    %798 = vmatpush1.msra.mxu0 %v780
    %799 = vmatprep.subr.mxu0 0.0
    %800 = vmatpush1.msra.mxu0 %v779
    %801 = vmatprep.subr.mxu0 0.0
    %802 = vmatpush1.msra.mxu0 %v778
    %803 = vmatprep.subr.mxu0 0.0
    %804 = vmatpush1.msra.mxu0 %v777
    %805 = vmatprep.subr.mxu0 0.0
    %806 = vmatpush1.msra.mxu0 %v776
    %807 = vmatprep.subr.mxu0 0.0
    %808 = vmatpush1.msra.mxu0 %v775
    %809 = vmatprep.subr.mxu0 0.0
    %810 = vmatpush1.msra.mxu0 %v774
    %811 = vmatprep.subr.mxu0 0.0
    %812 = vmatpush1.msra.mxu0 %v773
    %813 = vmatprep.subr.mxu0 0.0
    %814 = vmatpush1.msra.mxu0 %v772
    %815 = vmatprep.subr.mxu0 0.0
    %816 = vmatpush1.msra.mxu0 %v771
    %817 = vmatprep.subr.mxu0 0.0
    %818 = vmatpush1.msra.mxu0 %v770
    %819 = vmatprep.subr.mxu0 0.0
    %820 = vmatpush1.msra.mxu0 %v769
    %821 = vmatprep.subr.mxu0 0.0
    %822 = vmatpush2.msra.mxu0 0.0
    %823 = vmatprep.subr.mxu0 0.0
    %824 = vmatpush2.msra.mxu0 0.0
    %825 = vmatprep.subr.mxu0 0.0
    %826 = vmatpush2.msra.mxu0 0.0
    %827 = vmatprep.subr.mxu0 0.0
    %828 = vmatpush2.msra.mxu0 0.0
    %829 = vmatprep.subr.mxu0 0.0
    %830 = vmatpush2.msra.mxu0 0.0
    %831 = vmatprep.subr.mxu0 0.0
    %832 = vmatpush2.msra.mxu0 0.0
    %833 = vmatprep.subr.mxu0 0.0
    %834 = vmatpush2.msra.mxu0 0.0
    %835 = vmatprep.subr.mxu0 0.0
    %836 = vmatpush2.msra.mxu0 0.0
    %837 = vmatprep.subr.mxu0 0.0
    %838 = vmatpush2.msra.mxu0 0.0
    %839 = vmatprep.subr.mxu0 0.0
    %840 = vmatpush2.msra.mxu0 0.0
    %841 = vmatprep.subr.mxu0 0.0
    %842 = vmatpush2.msra.mxu0 0.0
    %843 = vmatprep.subr.mxu0 0.0
    %844 = vmatpush2.msra.mxu0 0.0
    %845 = vmatprep.subr.mxu0 0.0
    %846 = vmatpush2.msra.mxu0 0.0
    %847 = vmatprep.subr.mxu0 0.0
    %848 = vmatpush2.msra.mxu0 0.0
    %849 = vmatprep.subr.mxu0 0.0
    %850 = vmatpush2.msra.mxu0 0.0
    %851 = vmatprep.subr.mxu0 0.0
    %852 = vmatpush2.msra.mxu0 0.0
    %853 = vmatprep.mubr.f32.mxu0 0.0
    %854 = vmatmul.mubr.f32.gmra.mxu0 %v760
    %v855 = vpop.f32.mrf.mxu0
    %v856 = vadd.f32 %v788, %v855
    %v857 = vpop.f32.mrf.mxu0
    %858 = vmatprep.mubr.f32.mxu0 0.0
    %859 = vmatmul.mubr.f32.gmra.mxu0 %v761
    %v860 = vpop.f32.mrf.mxu0
    %v861 = vadd.f32 %v788, %v860
    %v862 = vpop.f32.mrf.mxu0
    %863 = vmatprep.mubr.f32.mxu0 0.0
    %864 = vmatmul.mubr.f32.gmra.mxu0 %v762
    %v865 = vpop.f32.mrf.mxu0
    %v866 = vadd.f32 %v788, %v865
    %v867 = vpop.f32.mrf.mxu0
    %868 = vmatprep.mubr.f32.mxu0 0.0
    %869 = vmatmul.mubr.f32.gmra.mxu0 %v763
    %v870 = vpop.f32.mrf.mxu0
    %v871 = vadd.f32 %v788, %v870
    %v872 = vpop.f32.mrf.mxu0
    %873 = vmatprep.mubr.f32.mxu0 0.0
    %874 = vmatmul.mubr.f32.gmra.mxu0 %v764
    %v875 = vpop.f32.mrf.mxu0
    %v876 = vadd.f32 %v788, %v875
    %v877 = vpop.f32.mrf.mxu0
    %878 = vmatprep.mubr.f32.mxu0 0.0
    %879 = vmatmul.mubr.f32.gmra.mxu0 %v765
    %v880 = vpop.f32.mrf.mxu0
    %v881 = vadd.f32 %v788, %v880
    %v882 = vpop.f32.mrf.mxu0
    %883 = vmatprep.mubr.f32.mxu0 0.0
    %884 = vmatmul.mubr.f32.gmra.mxu0 %v766
    %v885 = vpop.f32.mrf.mxu0
    %v886 = vadd.f32 %v788, %v885
    %v887 = vpop.f32.mrf.mxu0
    %888 = vmatprep.mubr.f32.mxu0 0.0
    %889 = vmatmul.mubr.f32.gmra.mxu0 %v767
    %v890 = vpop.f32.mrf.mxu0
    %v891 = vadd.f32 %v788, %v890
    %v892 = vpop.f32.mrf.mxu0
    %893 = vdwg.mxu0
    %894 = vxpose.xlu0.b32.start [1/16] %v856, 128
    %895 = vxpose.xlu0.b32.cont [2/16] %v861, 128
    %896 = vxpose.xlu0.b32.cont [3/16] %v866, 128
    %897 = vxpose.xlu0.b32.cont [4/16] %v871, 128
    %898 = vxpose.xlu0.b32.cont [5/16] %v876, 128
    %899 = vxpose.xlu0.b32.cont [6/16] %v881, 128
    %900 = vxpose.xlu0.b32.cont [7/16] %v886, 128
    %901 = vxpose.xlu0.b32.cont [8/16] %v891, 128
    %902 = vxpose.xlu0.b32.cont [9/16] 0.0, 128
    %903 = vxpose.xlu0.b32.cont [10/16] 0.0, 128
    %904 = vxpose.xlu0.b32.cont [11/16] 0.0, 128
    %905 = vxpose.xlu0.b32.cont [12/16] 0.0, 128
    %906 = vxpose.xlu0.b32.cont [13/16] 0.0, 128
    %907 = vxpose.xlu0.b32.cont [14/16] 0.0, 128
    %908 = vxpose.xlu0.b32.cont [15/16] 0.0, 128
    %909 = vxpose.xlu0.b32.end [16/16] 0.0, 128
    %v910 = vpop.trf.xlu0
    %v911 = vpop.trf.xlu0
    %v912 = vpop.trf.xlu0
    %v913 = vpop.trf.xlu0
    %v914 = vpop.trf.xlu0
    %v915 = vpop.trf.xlu0
    %v916 = vpop.trf.xlu0
    %v917 = vpop.trf.xlu0
    %v918 = vpop.trf.xlu0
    %v919 = vpop.trf.xlu0
    %v920 = vpop.trf.xlu0
    %v921 = vpop.trf.xlu0
    %v922 = vpop.trf.xlu0
    %v923 = vpop.trf.xlu0
    %v924 = vpop.trf.xlu0
    %v925 = vpop.trf.xlu0
    %v927 = vsel %vm214, %v910, 0
    %v930 = vsel %vm214, %v911, 0
    %v933 = vsel %vm214, %v912, 0
    %v936 = vsel %vm214, %v913, 0
    %v939 = vsel %vm214, %v914, 0
    %v942 = vsel %vm214, %v915, 0
    %v945 = vsel %vm214, %v916, 0
    %v948 = vsel %vm214, %v917, 0
    %v951 = vsel %vm214, %v918, 0
    %v954 = vsel %vm214, %v919, 0
    %v957 = vsel %vm214, %v920, 0
    %v960 = vsel %vm214, %v921, 0
    %v963 = vsel %vm214, %v922, 0
    %v966 = vsel %vm214, %v923, 0
    %v969 = vsel %vm214, %v924, 0
    %v972 = vsel %vm214, %v925, 0
    %974 = vmatprep.subr.mxu0 0.0
    %975 = vmatpush1.msra.mxu0 0.0
    %976 = vmatprep.subr.mxu0 0.0
    %977 = vmatpush1.msra.mxu0 0.0
    %978 = vmatprep.subr.mxu0 0.0
    %979 = vmatpush1.msra.mxu0 0.0
    %980 = vmatprep.subr.mxu0 0.0
    %981 = vmatpush1.msra.mxu0 0.0
    %982 = vmatprep.subr.mxu0 0.0
    %983 = vmatpush1.msra.mxu0 0.0
    %984 = vmatprep.subr.mxu0 0.0
    %985 = vmatpush1.msra.mxu0 0.0
    %986 = vmatprep.subr.mxu0 0.0
    %987 = vmatpush1.msra.mxu0 0.0
    %988 = vmatprep.subr.mxu0 0.0
    %989 = vmatpush1.msra.mxu0 0.0
    %990 = vmatprep.subr.mxu0 0.0
    %991 = vmatpush1.msra.mxu0 %v891
    %992 = vmatprep.subr.mxu0 0.0
    %993 = vmatpush1.msra.mxu0 %v886
    %994 = vmatprep.subr.mxu0 0.0
    %995 = vmatpush1.msra.mxu0 %v881
    %996 = vmatprep.subr.mxu0 0.0
    %997 = vmatpush1.msra.mxu0 %v876
    %998 = vmatprep.subr.mxu0 0.0
    %999 = vmatpush1.msra.mxu0 %v871
    %1000 = vmatprep.subr.mxu0 0.0
    %1001 = vmatpush1.msra.mxu0 %v866
    %1002 = vmatprep.subr.mxu0 0.0
    %1003 = vmatpush1.msra.mxu0 %v861
    %1004 = vmatprep.subr.mxu0 0.0
    %1005 = vmatpush1.msra.mxu0 %v856
    %1006 = vmatprep.subr.mxu0 0.0
    %1007 = vmatpush2.msra.mxu0 0.0
    %1008 = vmatprep.subr.mxu0 0.0
    %1009 = vmatpush2.msra.mxu0 0.0
    %1010 = vmatprep.subr.mxu0 0.0
    %1011 = vmatpush2.msra.mxu0 0.0
    %1012 = vmatprep.subr.mxu0 0.0
    %1013 = vmatpush2.msra.mxu0 0.0
    %1014 = vmatprep.subr.mxu0 0.0
    %1015 = vmatpush2.msra.mxu0 0.0
    %1016 = vmatprep.subr.mxu0 0.0
    %1017 = vmatpush2.msra.mxu0 0.0
    %1018 = vmatprep.subr.mxu0 0.0
    %1019 = vmatpush2.msra.mxu0 0.0
    %1020 = vmatprep.subr.mxu0 0.0
    %1021 = vmatpush2.msra.mxu0 0.0
    %1022 = vmatprep.subr.mxu0 0.0
    %1023 = vmatpush2.msra.mxu0 0.0
    %1024 = vmatprep.subr.mxu0 0.0
    %1025 = vmatpush2.msra.mxu0 0.0
    %1026 = vmatprep.subr.mxu0 0.0
    %1027 = vmatpush2.msra.mxu0 0.0
    %1028 = vmatprep.subr.mxu0 0.0
    %1029 = vmatpush2.msra.mxu0 0.0
    %1030 = vmatprep.subr.mxu0 0.0
    %1031 = vmatpush2.msra.mxu0 0.0
    %1032 = vmatprep.subr.mxu0 0.0
    %1033 = vmatpush2.msra.mxu0 0.0
    %1034 = vmatprep.subr.mxu0 0.0
    %1035 = vmatpush2.msra.mxu0 0.0
    %1036 = vmatprep.subr.mxu0 0.0
    %1037 = vmatpush2.msra.mxu0 0.0
    %1038 = vmatprep.mubr.f32.mxu0 0.0
    %1039 = vmatmul.mubr.f32.gmra.mxu0 %v927
    %v1040 = vpop.f32.mrf.mxu0
    %v1041 = vadd.f32 0.0, %v1040
    %v1042 = vpop.f32.mrf.mxu0
    %1043 = vmatprep.mubr.f32.mxu0 0.0
    %1044 = vmatmul.mubr.f32.gmra.mxu0 %v930
    %v1045 = vpop.f32.mrf.mxu0
    %v1046 = vadd.f32 0.0, %v1045
    %v1047 = vpop.f32.mrf.mxu0
    %1048 = vmatprep.mubr.f32.mxu0 0.0
    %1049 = vmatmul.mubr.f32.gmra.mxu0 %v933
    %v1050 = vpop.f32.mrf.mxu0
    %v1051 = vadd.f32 0.0, %v1050
    %v1052 = vpop.f32.mrf.mxu0
    %1053 = vmatprep.mubr.f32.mxu0 0.0
    %1054 = vmatmul.mubr.f32.gmra.mxu0 %v936
    %v1055 = vpop.f32.mrf.mxu0
    %v1056 = vadd.f32 0.0, %v1055
    %v1057 = vpop.f32.mrf.mxu0
    %1058 = vmatprep.mubr.f32.mxu0 0.0
    %1059 = vmatmul.mubr.f32.gmra.mxu0 %v939
    %v1060 = vpop.f32.mrf.mxu0
    %v1061 = vadd.f32 0.0, %v1060
    %v1062 = vpop.f32.mrf.mxu0
    %1063 = vmatprep.mubr.f32.mxu0 0.0
    %1064 = vmatmul.mubr.f32.gmra.mxu0 %v942
    %v1065 = vpop.f32.mrf.mxu0
    %v1066 = vadd.f32 0.0, %v1065
    %v1067 = vpop.f32.mrf.mxu0
    %1068 = vmatprep.mubr.f32.mxu0 0.0
    %1069 = vmatmul.mubr.f32.gmra.mxu0 %v945
    %v1070 = vpop.f32.mrf.mxu0
    %v1071 = vadd.f32 0.0, %v1070
    %v1072 = vpop.f32.mrf.mxu0
    %1073 = vmatprep.mubr.f32.mxu0 0.0
    %1074 = vmatmul.mubr.f32.gmra.mxu0 %v948
    %v1075 = vpop.f32.mrf.mxu0
    %v1076 = vadd.f32 0.0, %v1075
    %v1077 = vpop.f32.mrf.mxu0
    %1078 = vmatprep.mubr.f32.mxu0 0.0
    %1079 = vmatmul.mubr.f32.gmra.mxu0 %v951
    %v1080 = vpop.f32.mrf.mxu0
    %v1081 = vadd.f32 0.0, %v1080
    %v1082 = vpop.f32.mrf.mxu0
    %1083 = vmatprep.mubr.f32.mxu0 0.0
    %1084 = vmatmul.mubr.f32.gmra.mxu0 %v954
    %v1085 = vpop.f32.mrf.mxu0
    %v1086 = vadd.f32 0.0, %v1085
    %v1087 = vpop.f32.mrf.mxu0
    %1088 = vmatprep.mubr.f32.mxu0 0.0
    %1089 = vmatmul.mubr.f32.gmra.mxu0 %v957
    %v1090 = vpop.f32.mrf.mxu0
    %v1091 = vadd.f32 0.0, %v1090
    %v1092 = vpop.f32.mrf.mxu0
    %1093 = vmatprep.mubr.f32.mxu0 0.0
    %1094 = vmatmul.mubr.f32.gmra.mxu0 %v960
    %v1095 = vpop.f32.mrf.mxu0
    %v1096 = vadd.f32 0.0, %v1095
    %v1097 = vpop.f32.mrf.mxu0
    %1098 = vmatprep.mubr.f32.mxu0 0.0
    %1099 = vmatmul.mubr.f32.gmra.mxu0 %v963
    %v1100 = vpop.f32.mrf.mxu0
    %v1101 = vadd.f32 0.0, %v1100
    %v1102 = vpop.f32.mrf.mxu0
    %1103 = vmatprep.mubr.f32.mxu0 0.0
    %1104 = vmatmul.mubr.f32.gmra.mxu0 %v966
    %v1105 = vpop.f32.mrf.mxu0
    %v1106 = vadd.f32 0.0, %v1105
    %v1107 = vpop.f32.mrf.mxu0
    %1108 = vmatprep.mubr.f32.mxu0 0.0
    %1109 = vmatmul.mubr.f32.gmra.mxu0 %v969
    %v1110 = vpop.f32.mrf.mxu0
    %v1111 = vadd.f32 0.0, %v1110
    %v1112 = vpop.f32.mrf.mxu0
    %1113 = vmatprep.mubr.f32.mxu0 0.0
    %1114 = vmatmul.mubr.f32.gmra.mxu0 %v972
    %v1115 = vpop.f32.mrf.mxu0
    %v1116 = vadd.f32 0.0, %v1115
    %v1117 = vpop.f32.mrf.mxu0
    %1118 = vdwg.mxu0
    %1119 = vmax.xlane.f32.xlu0 %v1041
    %v1120 = vpop.xlane.xlu0 %1119
    %1121 = vmax.xlane.f32.xlu0 %v1046
    %v1122 = vpop.xlane.xlu0 %1121
    %1123 = vmax.xlane.f32.xlu0 %v1051
    %v1124 = vpop.xlane.xlu0 %1123
    %1125 = vmax.xlane.f32.xlu0 %v1056
    %v1126 = vpop.xlane.xlu0 %1125
    %1127 = vmax.xlane.f32.xlu0 %v1061
    %v1128 = vpop.xlane.xlu0 %1127
    %1129 = vmax.xlane.f32.xlu0 %v1066
    %v1130 = vpop.xlane.xlu0 %1129
    %1131 = vmax.xlane.f32.xlu0 %v1071
    %v1132 = vpop.xlane.xlu0 %1131
    %1133 = vmax.xlane.f32.xlu0 %v1076
    %v1134 = vpop.xlane.xlu0 %1133
    %1135 = vmax.xlane.f32.xlu0 %v1081
    %v1136 = vpop.xlane.xlu0 %1135
    %1137 = vmax.xlane.f32.xlu0 %v1086
    %v1138 = vpop.xlane.xlu0 %1137
    %1139 = vmax.xlane.f32.xlu0 %v1091
    %v1140 = vpop.xlane.xlu0 %1139
    %1141 = vmax.xlane.f32.xlu0 %v1096
    %v1142 = vpop.xlane.xlu0 %1141
    %1143 = vmax.xlane.f32.xlu0 %v1101
    %v1144 = vpop.xlane.xlu0 %1143
    %1145 = vmax.xlane.f32.xlu0 %v1106
    %v1146 = vpop.xlane.xlu0 %1145
    %1147 = vmax.xlane.f32.xlu0 %v1111
    %v1148 = vpop.xlane.xlu0 %1147
    %1149 = vmax.xlane.f32.xlu0 %v1116
    %v1150 = vpop.xlane.xlu0 %1149
    %v1151 = vsub.f32 %v1041, %v1120
    %v1152 = vsub.f32 %v1046, %v1122
    %v1153 = vsub.f32 %v1051, %v1124
    %v1154 = vsub.f32 %v1056, %v1126
    %v1155 = vsub.f32 %v1061, %v1128
    %v1156 = vsub.f32 %v1066, %v1130
    %v1157 = vsub.f32 %v1071, %v1132
    %v1158 = vsub.f32 %v1076, %v1134
    %v1159 = vsub.f32 %v1081, %v1136
    %v1160 = vsub.f32 %v1086, %v1138
    %v1161 = vsub.f32 %v1091, %v1140
    %v1162 = vsub.f32 %v1096, %v1142
    %v1163 = vsub.f32 %v1101, %v1144
    %v1164 = vsub.f32 %v1106, %v1146
    %v1165 = vsub.f32 %v1111, %v1148
    %v1166 = vsub.f32 %v1116, %v1150
    %v1167 = vmul.f32 %v1151, 1.442695
    %v1168 = vpow.pop %v1167
    %v1169 = vmul.f32 %v1152, 1.442695
    %v1170 = vpow.pop %v1169
    %v1171 = vmul.f32 %v1153, 1.442695
    %v1172 = vpow.pop %v1171
    %v1173 = vmul.f32 %v1154, 1.442695
    %v1174 = vpow.pop %v1173
    %v1175 = vmul.f32 %v1155, 1.442695
    %v1176 = vpow.pop %v1175
    %v1177 = vmul.f32 %v1156, 1.442695
    %v1178 = vpow.pop %v1177
    %v1179 = vmul.f32 %v1157, 1.442695
    %v1180 = vpow.pop %v1179
    %v1181 = vmul.f32 %v1158, 1.442695
    %v1182 = vpow.pop %v1181
    %v1183 = vmul.f32 %v1159, 1.442695
    %v1184 = vpow.pop %v1183
    %v1185 = vmul.f32 %v1160, 1.442695
    %v1186 = vpow.pop %v1185
    %v1187 = vmul.f32 %v1161, 1.442695
    %v1188 = vpow.pop %v1187
    %v1189 = vmul.f32 %v1162, 1.442695
    %v1190 = vpow.pop %v1189
    %v1191 = vmul.f32 %v1163, 1.442695
    %v1192 = vpow.pop %v1191
    %v1193 = vmul.f32 %v1164, 1.442695
    %v1194 = vpow.pop %v1193
    %v1195 = vmul.f32 %v1165, 1.442695
    %v1196 = vpow.pop %v1195
    %v1197 = vmul.f32 %v1166, 1.442695
    %v1198 = vpow.pop %v1197
    %1199 = vadd.xlane.f32.xlu0 %v1168
    %v1200 = vpop.xlane.xlu0 %1199
    %1201 = vadd.xlane.f32.xlu0 %v1170
    %v1202 = vpop.xlane.xlu0 %1201
    %1203 = vadd.xlane.f32.xlu0 %v1172
    %v1204 = vpop.xlane.xlu0 %1203
    %1205 = vadd.xlane.f32.xlu0 %v1174
    %v1206 = vpop.xlane.xlu0 %1205
    %1207 = vadd.xlane.f32.xlu0 %v1176
    %v1208 = vpop.xlane.xlu0 %1207
    %1209 = vadd.xlane.f32.xlu0 %v1178
    %v1210 = vpop.xlane.xlu0 %1209
    %1211 = vadd.xlane.f32.xlu0 %v1180
    %v1212 = vpop.xlane.xlu0 %1211
    %1213 = vadd.xlane.f32.xlu0 %v1182
    %v1214 = vpop.xlane.xlu0 %1213
    %1215 = vadd.xlane.f32.xlu0 %v1184
    %v1216 = vpop.xlane.xlu0 %1215
    %1217 = vadd.xlane.f32.xlu0 %v1186
    %v1218 = vpop.xlane.xlu0 %1217
    %1219 = vadd.xlane.f32.xlu0 %v1188
    %v1220 = vpop.xlane.xlu0 %1219
    %1221 = vadd.xlane.f32.xlu0 %v1190
    %v1222 = vpop.xlane.xlu0 %1221
    %1223 = vadd.xlane.f32.xlu0 %v1192
    %v1224 = vpop.xlane.xlu0 %1223
    %1225 = vadd.xlane.f32.xlu0 %v1194
    %v1226 = vpop.xlane.xlu0 %1225
    %1227 = vadd.xlane.f32.xlu0 %v1196
    %v1228 = vpop.xlane.xlu0 %1227
    %1229 = vadd.xlane.f32.xlu0 %v1198
    %v1230 = vpop.xlane.xlu0 %1229
    %v1231 = vrcp.pop %v1200
    %v1232 = vmul.f32 %v1168, %v1231
    %v1233 = vrcp.pop %v1202
    %v1234 = vmul.f32 %v1170, %v1233
    %v1235 = vrcp.pop %v1204
    %v1236 = vmul.f32 %v1172, %v1235
    %v1237 = vrcp.pop %v1206
    %v1238 = vmul.f32 %v1174, %v1237
    %v1239 = vrcp.pop %v1208
    %v1240 = vmul.f32 %v1176, %v1239
    %v1241 = vrcp.pop %v1210
    %v1242 = vmul.f32 %v1178, %v1241
    %v1243 = vrcp.pop %v1212
    %v1244 = vmul.f32 %v1180, %v1243
    %v1245 = vrcp.pop %v1214
    %v1246 = vmul.f32 %v1182, %v1245
    %v1247 = vrcp.pop %v1216
    %v1248 = vmul.f32 %v1184, %v1247
    %v1249 = vrcp.pop %v1218
    %v1250 = vmul.f32 %v1186, %v1249
    %v1251 = vrcp.pop %v1220
    %v1252 = vmul.f32 %v1188, %v1251
    %v1253 = vrcp.pop %v1222
    %v1254 = vmul.f32 %v1190, %v1253
    %v1255 = vrcp.pop %v1224
    %v1256 = vmul.f32 %v1192, %v1255
    %v1257 = vrcp.pop %v1226
    %v1258 = vmul.f32 %v1194, %v1257
    %v1259 = vrcp.pop %v1228
    %v1260 = vmul.f32 %v1196, %v1259
    %v1261 = vrcp.pop %v1230
    %v1262 = vmul.f32 %v1198, %v1261
    %v1263 = vmul.f32 %v856, 1.2
    %v1264 = vmul.f32 %v861, 1.2
    %v1265 = vmul.f32 %v866, 1.2
    %v1266 = vmul.f32 %v871, 1.2
    %v1267 = vmul.f32 %v876, 1.2
    %v1268 = vmul.f32 %v881, 1.2
    %v1269 = vmul.f32 %v886, 1.2
    %v1270 = vmul.f32 %v891, 1.2
    %1271 = vmatprep.subr.mxu0 0.0
    %1272 = vmatpush1.msra.mxu0 %v1262
    %1273 = vmatprep.subr.mxu0 0.0
    %1274 = vmatpush1.msra.mxu0 %v1260
    %1275 = vmatprep.subr.mxu0 0.0
    %1276 = vmatpush1.msra.mxu0 %v1258
    %1277 = vmatprep.subr.mxu0 0.0
    %1278 = vmatpush1.msra.mxu0 %v1256
    %1279 = vmatprep.subr.mxu0 0.0
    %1280 = vmatpush1.msra.mxu0 %v1254
    %1281 = vmatprep.subr.mxu0 0.0
    %1282 = vmatpush1.msra.mxu0 %v1252
    %1283 = vmatprep.subr.mxu0 0.0
    %1284 = vmatpush1.msra.mxu0 %v1250
    %1285 = vmatprep.subr.mxu0 0.0
    %1286 = vmatpush1.msra.mxu0 %v1248
    %1287 = vmatprep.subr.mxu0 0.0
    %1288 = vmatpush1.msra.mxu0 %v1246
    %1289 = vmatprep.subr.mxu0 0.0
    %1290 = vmatpush1.msra.mxu0 %v1244
    %1291 = vmatprep.subr.mxu0 0.0
    %1292 = vmatpush1.msra.mxu0 %v1242
    %1293 = vmatprep.subr.mxu0 0.0
    %1294 = vmatpush1.msra.mxu0 %v1240
    %1295 = vmatprep.subr.mxu0 0.0
    %1296 = vmatpush1.msra.mxu0 %v1238
    %1297 = vmatprep.subr.mxu0 0.0
    %1298 = vmatpush1.msra.mxu0 %v1236
    %1299 = vmatprep.subr.mxu0 0.0
    %1300 = vmatpush1.msra.mxu0 %v1234
    %1301 = vmatprep.subr.mxu0 0.0
    %1302 = vmatpush1.msra.mxu0 %v1232
    %1303 = vmatprep.subr.mxu0 0.0
    %1304 = vmatpush2.msra.mxu0 0.0
    %1305 = vmatprep.subr.mxu0 0.0
    %1306 = vmatpush2.msra.mxu0 0.0
    %1307 = vmatprep.subr.mxu0 0.0
    %1308 = vmatpush2.msra.mxu0 0.0
    %1309 = vmatprep.subr.mxu0 0.0
    %1310 = vmatpush2.msra.mxu0 0.0
    %1311 = vmatprep.subr.mxu0 0.0
    %1312 = vmatpush2.msra.mxu0 0.0
    %1313 = vmatprep.subr.mxu0 0.0
    %1314 = vmatpush2.msra.mxu0 0.0
    %1315 = vmatprep.subr.mxu0 0.0
    %1316 = vmatpush2.msra.mxu0 0.0
    %1317 = vmatprep.subr.mxu0 0.0
    %1318 = vmatpush2.msra.mxu0 0.0
    %1319 = vmatprep.subr.mxu0 0.0
    %1320 = vmatpush2.msra.mxu0 0.0
    %1321 = vmatprep.subr.mxu0 0.0
    %1322 = vmatpush2.msra.mxu0 0.0
    %1323 = vmatprep.subr.mxu0 0.0
    %1324 = vmatpush2.msra.mxu0 0.0
    %1325 = vmatprep.subr.mxu0 0.0
    %1326 = vmatpush2.msra.mxu0 0.0
    %1327 = vmatprep.subr.mxu0 0.0
    %1328 = vmatpush2.msra.mxu0 0.0
    %1329 = vmatprep.subr.mxu0 0.0
    %1330 = vmatpush2.msra.mxu0 0.0
    %1331 = vmatprep.subr.mxu0 0.0
    %1332 = vmatpush2.msra.mxu0 0.0
    %1333 = vmatprep.subr.mxu0 0.0
    %1334 = vmatpush2.msra.mxu0 0.0
    %1335 = vmatprep.mubr.f32.mxu0 0.0
    %1336 = vmatmul.mubr.f32.gmra.mxu0 %v856
    %v1337 = vpop.f32.mrf.mxu0
    %v1338 = vadd.f32 0.0, %v1337
    %v1339 = vpop.f32.mrf.mxu0
    %1340 = vmatprep.mubr.f32.mxu0 0.0
    %1341 = vmatmul.mubr.f32.gmra.mxu0 %v861
    %v1342 = vpop.f32.mrf.mxu0
    %v1343 = vadd.f32 0.0, %v1342
    %v1344 = vpop.f32.mrf.mxu0
    %1345 = vmatprep.mubr.f32.mxu0 0.0
    %1346 = vmatmul.mubr.f32.gmra.mxu0 %v866
    %v1347 = vpop.f32.mrf.mxu0
    %v1348 = vadd.f32 0.0, %v1347
    %v1349 = vpop.f32.mrf.mxu0
    %1350 = vmatprep.mubr.f32.mxu0 0.0
    %1351 = vmatmul.mubr.f32.gmra.mxu0 %v871
    %v1352 = vpop.f32.mrf.mxu0
    %v1353 = vadd.f32 0.0, %v1352
    %v1354 = vpop.f32.mrf.mxu0
    %1355 = vmatprep.mubr.f32.mxu0 0.0
    %1356 = vmatmul.mubr.f32.gmra.mxu0 %v876
    %v1357 = vpop.f32.mrf.mxu0
    %v1358 = vadd.f32 0.0, %v1357
    %v1359 = vpop.f32.mrf.mxu0
    %1360 = vmatprep.mubr.f32.mxu0 0.0
    %1361 = vmatmul.mubr.f32.gmra.mxu0 %v881
    %v1362 = vpop.f32.mrf.mxu0
    %v1363 = vadd.f32 0.0, %v1362
    %v1364 = vpop.f32.mrf.mxu0
    %1365 = vmatprep.mubr.f32.mxu0 0.0
    %1366 = vmatmul.mubr.f32.gmra.mxu0 %v886
    %v1367 = vpop.f32.mrf.mxu0
    %v1368 = vadd.f32 0.0, %v1367
    %v1369 = vpop.f32.mrf.mxu0
    %1370 = vmatprep.mubr.f32.mxu0 0.0
    %1371 = vmatmul.mubr.f32.gmra.mxu0 %v891
    %v1372 = vpop.f32.mrf.mxu0
    %v1373 = vadd.f32 0.0, %v1372
    %v1374 = vpop.f32.mrf.mxu0
    %1375 = vdwg.mxu0
    %v1376 = vmul.f32 %v1338, 0.2
    %v1377 = vmul.f32 %v1343, 0.2
    %v1378 = vmul.f32 %v1348, 0.2
    %v1379 = vmul.f32 %v1353, 0.2
    %v1380 = vmul.f32 %v1358, 0.2
    %v1381 = vmul.f32 %v1363, 0.2
    %v1382 = vmul.f32 %v1368, 0.2
    %v1383 = vmul.f32 %v1373, 0.2
    %v1384 = vsub.f32 %v1263, %v1376
    %v1385 = vsub.f32 %v1264, %v1377
    %v1386 = vsub.f32 %v1265, %v1378
    %v1387 = vsub.f32 %v1266, %v1379
    %v1388 = vsub.f32 %v1267, %v1380
    %v1389 = vsub.f32 %v1268, %v1381
    %v1390 = vsub.f32 %v1269, %v1382
    %v1391 = vsub.f32 %v1270, %v1383
    %v1392 = vadd.f32 %v1384, %v1385
    %v1393 = vadd.f32 %v1392, %v1386
    %v1394 = vadd.f32 %v1393, %v1387
    %v1395 = vadd.f32 %v1394, %v1388
    %v1396 = vadd.f32 %v1395, %v1389
    %v1397 = vadd.f32 %v1396, %v1390
    %v1398 = vadd.f32 %v1397, %v1391
    %v1399 = vrot.slane %v1398, 4
    %v1400 = vadd.f32 %v1398, %v1399
    %v1401 = vrot.slane %v1400, 2
    %v1402 = vadd.f32 %v1400, %v1401
    %v1403 = vrot.slane %v1402, 1
    %v1404 = vadd.f32 %v1402, %v1403
    %v1405 = vmul.f32 %v1404, %v694
    %v1406 = vsub.f32 %v1384, %v1405
    %v1407 = vsub.f32 %v1385, %v1405
    %v1408 = vsub.f32 %v1386, %v1405
    %v1409 = vsub.f32 %v1387, %v1405
    %v1410 = vsub.f32 %v1388, %v1405
    %v1411 = vsub.f32 %v1389, %v1405
    %v1412 = vsub.f32 %v1390, %v1405
    %v1413 = vsub.f32 %v1391, %v1405
    %v1414 = vmul.f32 %v1406, %v1406
    %v1415 = vmul.f32 %v1407, %v1407
    %v1416 = vmul.f32 %v1408, %v1408
    %v1417 = vmul.f32 %v1409, %v1409
    %v1418 = vmul.f32 %v1410, %v1410
    %v1419 = vmul.f32 %v1411, %v1411
    %v1420 = vmul.f32 %v1412, %v1412
    %v1421 = vmul.f32 %v1413, %v1413
    %v1422 = vadd.f32 %v1414, %v1415
    %v1423 = vadd.f32 %v1422, %v1416
    %v1424 = vadd.f32 %v1423, %v1417
    %v1425 = vadd.f32 %v1424, %v1418
    %v1426 = vadd.f32 %v1425, %v1419
    %v1427 = vadd.f32 %v1426, %v1420
    %v1428 = vadd.f32 %v1427, %v1421
    %v1429 = vrot.slane %v1428, 4
    %v1430 = vadd.f32 %v1428, %v1429
    %v1431 = vrot.slane %v1430, 2
    %v1432 = vadd.f32 %v1430, %v1431
    %v1433 = vrot.slane %v1432, 1
    %v1434 = vadd.f32 %v1432, %v1433
    %v1435 = vmul.f32 %v1434, %v694
    %v1436 = vadd.f32 %v1435, 1e-05
    %v1437 = vrsqrt.pop %v1436
    %v1438 = vmul.f32 %v1406, %v1437
    %v1439 = vmul.f32 %v1407, %v1437
    %v1440 = vmul.f32 %v1408, %v1437
    %v1441 = vmul.f32 %v1409, %v1437
    %v1442 = vmul.f32 %v1410, %v1437
    %v1443 = vmul.f32 %v1411, %v1437
    %v1444 = vmul.f32 %v1412, %v1437
    %v1445 = vmul.f32 %v1413, %v1437
    %v1446 = vlaneseq
    %v1447 = vshrl.u32 %v1446, 7
    %v1448 = vsub.s32 1, %v1447
    %v1449 = vrot.slane %v768, %v1448
    %v1450 = vmul.f32 %v1438, %v1449
    %v1451 = vmul.f32 %v1439, %v1449
    %v1452 = vmul.f32 %v1440, %v1449
    %v1453 = vmul.f32 %v1441, %v1449
    %v1454 = vmul.f32 %v1442, %v1449
    %v1455 = vmul.f32 %v1443, %v1449
    %v1456 = vmul.f32 %v1444, %v1449
    %v1457 = vmul.f32 %v1445, %v1449
    %v1458 = vlaneseq
    %v1459 = vshrl.u32 %v1458, 7
    %v1460 = vsub.s32 2, %v1459
    %v1461 = vrot.slane %v768, %v1460
    %v1462 = vadd.f32 %v1450, %v1461
    %v1463 = vadd.f32 %v1451, %v1461
    %v1464 = vadd.f32 %v1452, %v1461
    %v1465 = vadd.f32 %v1453, %v1461
    %v1466 = vadd.f32 %v1454, %v1461
    %v1467 = vadd.f32 %v1455, %v1461
    %v1468 = vadd.f32 %v1456, %v1461
    %v1469 = vadd.f32 %v1457, %v1461
    %v1470 = vmax.f32 %v1462, 0.0
    %v1471 = vmax.f32 %v1463, 0.0
    %v1472 = vmax.f32 %v1464, 0.0
    %v1473 = vmax.f32 %v1465, 0.0
    %v1474 = vmax.f32 %v1466, 0.0
    %v1475 = vmax.f32 %v1467, 0.0
    %v1476 = vmax.f32 %v1468, 0.0
    %v1477 = vmax.f32 %v1469, 0.0
    %1478 = vst [vmem:[#allocation5] sm:$0xff] %v1470
    %1479 = vst [vmem:[#allocation5 + $0x8] sm:$0xff] %v1471
    %1480 = vst [vmem:[#allocation5 + $0x10] sm:$0xff] %v1472
    %1481 = vst [vmem:[#allocation5 + $0x18] sm:$0xff] %v1473
    %1482 = vst [vmem:[#allocation5 + $0x20] sm:$0xff] %v1474
    %1483 = vst [vmem:[#allocation5 + $0x28] sm:$0xff] %v1475
    %1484 = vst [vmem:[#allocation5 + $0x30] sm:$0xff] %v1476
    %1485 = vst [vmem:[#allocation5 + $0x38] sm:$0xff] %v1477
    // Predicated region
    $region26: #{tpu_custom_call.1} parent=1 // pred_check
      _
    $region27: #{tpu_custom_call.1} parent=1 // pred_check_branch
      %1487 = sbr.rel (0) target = $region29
    $region28: #{tpu_custom_call.1} parent=1 // pred_region
      %s1489 = ssub.s32 1024, 1024
      %1490 = vsyncadd [#allocation4], %s1489
      %s1491 = sshll.u32 [#allocation5], 4
      %s1492 = int_to_ptr.vmem [resolvable:$true] %s1491
      %1497 = dma.vmem_to_hbm [thread:$0]  %s1492, 1024, %s5, [#allocation4], 128, 128, 8
    $region29: #{tpu_custom_call.1} parent=1 // pred_fallthru
      _
    // Predicated region
    $region30: #{tpu_custom_call.1} parent=1 // pred_check
      _
    $region31: #{tpu_custom_call.1} parent=1 // pred_check_branch
      %1499 = sbr.rel (0) target = $region33
    $region32: #{tpu_custom_call.1} parent=1 // pred_region
      %1500 = dma.done [#allocation4], 1024
    $region33: #{tpu_custom_call.1} parent=1 // pred_fallthru
      _
    %1501 = vsyncpa [#allocation3], 1
    %1502 = vsyncpa [#allocation4], 1

</llo_original>
